<compile_context>
chip_gen: v6e
topology: v6e:2x2x1
jax: 0.10.0
libtpu: 0.0.40
codegen_flags: <defaults>
</compile_context>

<pallas_src>
import jax
import jax.numpy as jnp
from jax.experimental import pallas as pl
from jax.experimental.pallas import tpu as pltpu


def embedding_forward(tokens, features, embed_table, proj_w_t, proj_b, *, tile_m=None):
    """Fused embedding-gather + feature-projection + concat.

    tokens:      (B, S, 1)              int32
    features:    (B, S, n_feature)      float32
    embed_table: (n_token, d_embed)     float32
    proj_w_t:    (n_feature, d_feature) float32  (Linear weight, transposed)
    proj_b:      (1, d_feature) or (d_feature,)  float32
    returns:     (B, S, d_embed + d_feature) float32
    """
    B, S, _ = tokens.shape
    n_token, d_embed = embed_table.shape
    n_feature, d_feature = proj_w_t.shape
    d_out = d_embed + d_feature

    # Collapse (B, S) -> M.
    M = B * S
    tok_flat = tokens.reshape(M, 1).astype(jnp.int32)
    feat_flat = features.reshape(M, n_feature).astype(jnp.float32)

    if tile_m is None:
        # >= 2 grid steps so both v7x TensorCores share the HBM writeback;
        # cap at 512 rows (output block 512x256 f32 = 0.5 MiB, x2 buffers).
        half = -(-((M + 1) // 2) // 8) * 8          # ceil(M/2) to multiple of 8
        tile_m = max(8, min(512, half))

    m_pad = pl.cdiv(M, tile_m) * tile_m
    if m_pad != M:
        # TODO(synk): for production ragged M, mask the tail tile in-kernel
        # instead of materializing padded/sliced HBM copies.
        tok_flat = jnp.pad(tok_flat, ((0, m_pad - M), (0, 0)))
        feat_flat = jnp.pad(feat_flat, ((0, m_pad - M), (0, 0)))
    n_tiles = m_pad // tile_m

    # Block-diagonal fused RHS:  [[table, 0], [0, W], [0, b], [0, 0]].
    K = n_token + n_feature + 1
    k_pad = -(-K // 8) * 8                          # sublane-pad contraction dim
    rhs = jnp.zeros((k_pad, d_out), jnp.float32)
    rhs = rhs.at[:n_token, :d_embed].set(embed_table.astype(jnp.float32))
    rhs = rhs.at[n_token:n_token + n_feature, d_embed:].set(proj_w_t.astype(jnp.float32))
    rhs = rhs.at[n_token + n_feature, d_embed:].set(
        jnp.asarray(proj_b, jnp.float32).reshape(-1))

    def kernel(tok_ref, feat_ref, rhs_ref, out_ref):
        # tok_ref:  (tile_m, 1)        int32
        # feat_ref: (tile_m, n_feature) f32
        # rhs_ref:  (k_pad, d_out)      f32   (grid-invariant)
        # out_ref:  (tile_m, d_out)     f32
        tm = tok_ref.shape[0]

        # One-hot over the vocab columns (exact row select when the dot runs
        # at f32 precision).  Out-of-range ids produce an all-zero row.
        tok = tok_ref[...]                                              # (tm, 1)
        ids = jax.lax.broadcasted_iota(jnp.int32, (tm, n_token), 1)     # (tm, n_token)
        onehot = (tok == ids).astype(jnp.float32)

        # Fused LHS = [onehot | features | 1 | 0-pad]  -> (tm, k_pad).
        parts = [onehot, feat_ref[...], jnp.ones((tm, 1), jnp.float32)]
        if k_pad > K:
            parts.append(jnp.zeros((tm, k_pad - K), jnp.float32))
        lhs = jnp.concatenate(parts, axis=-1)

        # Single MXU matmul: gather + projection + bias + concat, stored once.
        out_ref[...] = jnp.dot(lhs, rhs_ref[...],
                               preferred_element_type=jnp.float32,
                               precision=jax.lax.Precision.HIGHEST)

    flops = 2 * m_pad * k_pad * d_out
    bytes_accessed = 4 * (tok_flat.size + feat_flat.size + rhs.size + m_pad * d_out)

    grid_spec = pltpu.PrefetchScalarGridSpec(
        num_scalar_prefetch=0,
        grid=(n_tiles,),
        in_specs=[
            pl.BlockSpec((tile_m, 1), lambda i: (i, 0)),
            pl.BlockSpec((tile_m, n_feature), lambda i: (i, 0)),
            pl.BlockSpec((k_pad, d_out), lambda i: (0, 0)),     # grid-invariant
        ],
        out_specs=pl.BlockSpec((tile_m, d_out), lambda i: (i, 0)),
    )

    out = pl.pallas_call(
        kernel,
        out_shape=jax.ShapeDtypeStruct((m_pad, d_out), jnp.float32),
        grid_spec=grid_spec,
        compiler_params=pltpu.CompilerParams(
            dimension_semantics=("parallel",)),
        cost_estimate=pl.CostEstimate(flops=flops, transcendentals=0,
                                      bytes_accessed=bytes_accessed),
    )(tok_flat, feat_flat, rhs)

    if m_pad != M:
        out = out[:M]
    return out.reshape(B, S, d_out)


if __name__ == "__main__":
    # Module config (n_feature > 0 and d_feature > n_feature -> proj branch active).
    n_token, d_embed = 32, 128
    n_feature, d_feature = 8, 128
    B, S = 2, 256            # M = 512 -> 2 parallel grid steps of 256 rows

    key = jax.random.PRNGKey(0)
    k_tok, k_feat, k_emb, k_w, k_b = jax.random.split(key, 5)

    tokens = jax.random.randint(k_tok, (B, S, 1), 0, n_token, dtype=jnp.int32)
    features = jax.random.normal(k_feat, (B, S, n_feature), dtype=jnp.float32)

    # Deterministic parameter init (nn.Embedding ~ N(0,1); nn.Linear ~ uniform).
    embed_table = jax.random.normal(k_emb, (n_token, d_embed), dtype=jnp.float32)
    bound = 1.0 / (n_feature ** 0.5)
    proj_w = jax.random.uniform(k_w, (d_feature, n_feature), jnp.float32,
                                minval=-bound, maxval=bound)   # torch Linear weight
    proj_b = jax.random.uniform(k_b, (1, d_feature), jnp.float32,
                                minval=-bound, maxval=bound)
    proj_w_t = proj_w.T                                         # (n_feature, d_feature)

    out = embedding_forward(tokens, features, embed_table, proj_w_t, proj_b)
    out = jax.block_until_ready(out)

    # Pure-JAX reference of the torch forward.
    tok_sq = tokens[..., 0]                                     # squeeze trailing 1
    ref = jnp.concatenate(
        [embed_table[tok_sq], features @ proj_w_t + proj_b[0]], axis=2)

    assert out.shape == (B, S, d_embed + d_feature)
    assert jnp.allclose(out, ref, atol=1e-4, rtol=1e-4), "mismatch vs reference"

    # TODO(synk): the n_feature == 0 (lookup only) and d_feature <= n_feature
    # (raw-feature concat) branches reduce to the same fused matmul with a
    # table-only / identity-W RHS and are not exercised by this demo config.
    print("KERNEL_OK")
</pallas_src>

<mosaic_0001>
module attributes {stable_mosaic.version = 11 : i64} {
  func.func @kernel(%arg0: i32, %arg1: memref<256x1xi32, #tpu.memory_space<vmem>>, %arg2: memref<256x8xf32, #tpu.memory_space<vmem>>, %arg3: memref<48x256xf32, #tpu.memory_space<vmem>>, %arg4: memref<256x256xf32, #tpu.memory_space<vmem>>) attributes {dimension_semantics = [#tpu.dimension_semantics<parallel>], iteration_bounds = array<i64: 2>, scalar_prefetch = 0 : i64, scratch_operands = 0 : i64, tpu.core_type = #tpu.core_type<tc>, window_params = [{transform_indices = @transform_0, window_bounds = array<i64: 256, 1>}, {transform_indices = @transform_1, window_bounds = array<i64: 256, 8>}, {pipeline_mode = #tpu.pipeline_mode<synchronous>, transform_indices = @transform_2, window_bounds = array<i64: 48, 256>}, {transform_indices = @transform_3, window_bounds = array<i64: 256, 256>}]} {
    %c0 = arith.constant 0 : index
    %c0_0 = arith.constant 0 : index
    %0 = vector.load %arg1[%c0, %c0_0] : memref<256x1xi32, #tpu.memory_space<vmem>>, vector<256x1xi32>
    %1 = tpu.iota {dimensions = array<i32: 1>} : vector<256x32xi32>
    %2 = vector.broadcast %0 : vector<256x1xi32> to vector<256x32xi32>
    %3 = arith.cmpi eq, %2, %1 : vector<256x32xi32>
    %4 = arith.extui %3 : vector<256x32xi1> to vector<256x32xi32>
    %5 = arith.sitofp %4 : vector<256x32xi32> to vector<256x32xf32>
    %c0_1 = arith.constant 0 : index
    %c0_2 = arith.constant 0 : index
    %6 = vector.load %arg2[%c0_1, %c0_2] : memref<256x8xf32, #tpu.memory_space<vmem>>, vector<256x8xf32>
    %cst = arith.constant 1.000000e+00 : f32
    %7 = vector.broadcast %cst : f32 to vector<256x1xf32>
    %cst_3 = arith.constant 0.000000e+00 : f32
    %8 = vector.broadcast %cst_3 : f32 to vector<256x7xf32>
    %9 = tpu.concatenate %5, %6, %7, %8 in 1 : vector<256x32xf32>, vector<256x8xf32>, vector<256x1xf32>, vector<256x7xf32> -> vector<256x48xf32>
    %c0_4 = arith.constant 0 : index
    %c0_5 = arith.constant 0 : index
    %10 = vector.load %arg3[%c0_4, %c0_5] : memref<48x256xf32, #tpu.memory_space<vmem>>, vector<48x256xf32>
    %cst_6 = arith.constant dense<0.000000e+00> : vector<256x256xf32>
    %11 = tpu.matmul %9, %10, %cst_6 {dimension_numbers = #tpu.dot_dimension_numbers<[1], [0], [0], [1], [0, 0, 1, 1], [], []>, precision = #tpu.contract_precision<fp32>} : vector<256x48xf32>, vector<48x256xf32>, vector<256x256xf32> -> vector<256x256xf32>
    %c0_7 = arith.constant 0 : index
    %c0_8 = arith.constant 0 : index
    %12 = vector.load %arg4[%c0_7, %c0_8] : memref<256x256xf32, #tpu.memory_space<vmem>>, vector<256x256xf32>
    tpu.vector_store %arg4[%c0_7, %c0_8], %11 {strides = array<i32>} : memref<256x256xf32, #tpu.memory_space<vmem>>, vector<256x256xf32>,
    return
  }
  func.func @transform_0(%arg0: i32) -> (i32, i32) {
    %c0_i32 = arith.constant 0 : i32
    %c0_i32_0 = arith.constant 0 : i32
    return %arg0, %c0_i32 : i32, i32
  }
  func.func @transform_1(%arg0: i32) -> (i32, i32) {
    %c0_i32 = arith.constant 0 : i32
    %c0_i32_0 = arith.constant 0 : i32
    return %arg0, %c0_i32 : i32, i32
  }
  func.func @transform_2(%arg0: i32) -> (i32, i32) {
    %c0_i32 = arith.constant 0 : i32
    %c0_i32_0 = arith.constant 0 : i32
    %c0_i32_1 = arith.constant 0 : i32
    return %c0_i32, %c0_i32_0 : i32, i32
  }
  func.func @transform_3(%arg0: i32) -> (i32, i32) {
    %c0_i32 = arith.constant 0 : i32
    %c0_i32_0 = arith.constant 0 : i32
    return %arg0, %c0_i32 : i32, i32
  }
}

</mosaic_0001>

<llo_original>
// kernel: tpu_custom_call.1
$region0: #{tpu_custom_call.1}
  #allocation0 [shape = 'u32[]', space=smem, size = 0x4, offset = 0x4, fixed_abs, tag = 'smem constant byte address 0x4 - core index']
  #allocation1 [shape = 'u32[144,128]{1,0:T(1,128)}', space=vmem, size = 0x12000, scoped, tag = 'internal scratch']
  %s0 = inlined_call_operand.vmem [shape: s32[512,1], index: 0, kind: input, shape index: {}]
  %s1 = inlined_call_operand.vmem [shape: f32[512,8], index: 1, kind: input, shape index: {}]
  %s2 = inlined_call_operand.vmem [shape: f32[48,256], index: 2, kind: input, shape index: {}]
  %s3 = inlined_call_operand.hbm [shape: f32[512,256], index: 3, kind: output, shape index: {}]
  %s4 = sld [smem:[#allocation0]]
  $region45: #{tpu_custom_call.1} parent=0
    _
  %s6 = ssub.s32 1, %s4
  %s7 = scalar_select 0, %s6, %s4
  $region1: #{tpu_custom_call.1} parent=0
    #allocation2 [shape = 'u8[524288]{0}', space=vmem, size = 0x80000, scoped, tag = 'output window, operand 0']
    #allocation3 [shape = 's32[2]{0}', space=sflag, size = 0x8, scoped, tag = 'scoped memory for tpu_custom_call.1']
    %8 = vsyncpa [#allocation3], 0
    %s9 = scalar_lea.sflag [#allocation3], 1
    %10 = vsyncpa %s9, 0
    loop: start=0, step=1, limit=4
    $region2: #{tpu_custom_call.1} parent=1 // loop_pre_header
      _
    $region3: #{tpu_custom_call.1} parent=1 // loop_header
      %s12 = sphi 0, %s16
      %p13 = scmp.ge.s32.totalorder %s12, 4
      %s22 = sphi 0, %s24
      %s25 = sphi 0, %s22
      %s26 = sphi 0, %s25
      %s42 = sphi 0, %s26
      %s48 = sphi 0, %s50
      %s51 = sphi 0, %s48
      %s52 = sphi 0, %s51
      %s68 = sphi 0, %s52
      %s72 = sphi 0, %s72
      %s74 = sphi 0, %s72
      %s75 = sphi 0, %s74
      %s89 = sphi 0, %s75
      %s95 = sphi 0, %s97
      %s98 = sphi 0, %s95
      %s99 = sphi 0, %s98
      %s115 = sphi 0, %s99
    $region4: #{tpu_custom_call.1} parent=1 // loop_header_branch
      %15 = sbr.rel (%p13) target = $region8
    $region5: #{tpu_custom_call.1} parent=1 // loop_body
      %s17 = ssub.s32 %s12, 1
      %s18 = ssub.s32 %s12, 2
      %s19 = sadd.s32 %s12, 1
      %s20 = ssub.s32 %s12, %s19
      %p21 = scmp.eq.s32.totalorder %s20, 0
      %s23 = sadd.s32 %s22, 1
      %s24 = scalar_select %p21, %s22, %s23
      %p27 = pneg %p21
      %p28 = scmp.eq.s32.totalorder %s12, 1
      %p29 = por %p27, %p28
      %p30 = scmp.ne.s32.totalorder %s22, %s25
      %p31 = scmp.eq.s32.totalorder %s12, 0
      %p32 = por %p30, %p31
      %p33 = scmp.ne.s32.totalorder %s22, %s25
      %p34 = scmp.eq.s32.totalorder %s17, 1
      %p35 = por %p33, %p34
      %p36 = scmp.ne.s32.totalorder %s25, %s26
      %p37 = scmp.eq.s32.totalorder %s17, 0
      %p38 = por %p36, %p37
      %p39 = scmp.ne.s32.totalorder %s25, %s26
      %p40 = scmp.eq.s32.totalorder %s18, 1
      %p41 = por %p39, %p40
      %p43 = scmp.ne.s32.totalorder %s26, %s42
      %p44 = scmp.eq.s32.totalorder %s18, 0
      %p45 = por %p43, %p44
      %s46 = ssub.s32 %s12, %s19
      %p47 = scmp.eq.s32.totalorder %s46, 0
      %s49 = sadd.s32 %s48, 1
      %s50 = scalar_select %p47, %s48, %s49
      %p53 = pneg %p47
      %p54 = scmp.eq.s32.totalorder %s12, 1
      %p55 = por %p53, %p54
      %p56 = scmp.ne.s32.totalorder %s48, %s51
      %p57 = scmp.eq.s32.totalorder %s12, 0
      %p58 = por %p56, %p57
      %p59 = scmp.ne.s32.totalorder %s48, %s51
      %p60 = scmp.eq.s32.totalorder %s17, 1
      %p61 = por %p59, %p60
      %p62 = scmp.ne.s32.totalorder %s51, %s52
      %p63 = scmp.eq.s32.totalorder %s17, 0
      %p64 = por %p62, %p63
      %p65 = scmp.ne.s32.totalorder %s51, %s52
      %p66 = scmp.eq.s32.totalorder %s18, 1
      %p67 = por %p65, %p66
      %p69 = scmp.ne.s32.totalorder %s52, %s68
      %p70 = scmp.eq.s32.totalorder %s18, 0
      %p71 = por %p69, %p70
      %s73 = sadd.s32 %s72, 1
      %p76 = scmp.eq.s32.totalorder %s12, 1
      %p77 = scmp.ne.s32.totalorder %s72, %s74
      %p78 = scmp.eq.s32.totalorder %s12, 0
      %p79 = por %p77, %p78
      %p80 = scmp.ne.s32.totalorder %s72, %s74
      %p81 = scmp.eq.s32.totalorder %s17, 1
      %p82 = por %p80, %p81
      %p83 = scmp.ne.s32.totalorder %s74, %s75
      %p84 = scmp.eq.s32.totalorder %s17, 0
      %p85 = por %p83, %p84
      %p86 = scmp.ne.s32.totalorder %s74, %s75
      %p87 = scmp.eq.s32.totalorder %s18, 1
      %p88 = por %p86, %p87
      %p90 = scmp.ne.s32.totalorder %s75, %s89
      %p91 = scmp.eq.s32.totalorder %s18, 0
      %p92 = por %p90, %p91
      %s93 = ssub.s32 %s12, %s19
      %p94 = scmp.eq.s32.totalorder %s93, 0
      %s96 = sadd.s32 %s95, 1
      %s97 = scalar_select %p94, %s95, %s96
      %p100 = pneg %p94
      %p101 = scmp.eq.s32.totalorder %s12, 1
      %p102 = por %p100, %p101
      %p103 = scmp.ne.s32.totalorder %s95, %s98
      %p104 = scmp.eq.s32.totalorder %s12, 0
      %p105 = por %p103, %p104
      %p106 = scmp.ne.s32.totalorder %s95, %s98
      %p107 = scmp.eq.s32.totalorder %s17, 1
      %p108 = por %p106, %p107
      %p109 = scmp.ne.s32.totalorder %s98, %s99
      %p110 = scmp.eq.s32.totalorder %s17, 0
      %p111 = por %p109, %p110
      %p112 = scmp.ne.s32.totalorder %s98, %s99
      %p113 = scmp.eq.s32.totalorder %s18, 1
      %p114 = por %p112, %p113
      %p116 = scmp.ne.s32.totalorder %s99, %s115
      %p117 = scmp.eq.s32.totalorder %s18, 0
      %p118 = por %p116, %p117
      %p119 = scmp.le.s32.totalorder 1, %s12
      %p120 = scmp.lt.s32.totalorder %s12, 3
      %p121 = pnand %p119, %p120
      %p122 = pneg %p121
      // Predicated region
      $region9: #{tpu_custom_call.1} parent=5 // pred_check
        _
      $region10: #{tpu_custom_call.1} parent=5 // pred_check_branch
        %124 = sbr.rel (%p121) target = $region12
      $region11: #{tpu_custom_call.1} parent=5 // pred_region
        %s125 = ssub.s32 %s12, 1
        // Predicated region
        $region13: #{tpu_custom_call.1} parent=11 // pred_check
          %p126 = pneg %p85
        $region14: #{tpu_custom_call.1} parent=11 // pred_check_branch
          %128 = sbr.rel (%p126) target = $region16
        $region15: #{tpu_custom_call.1} parent=11 // pred_region
          _
        $region16: #{tpu_custom_call.1} parent=11 // pred_fallthru
          _
      $region12: #{tpu_custom_call.1} parent=5 // pred_fallthru
        _
      %p129 = scmp.lt.s32.totalorder %s12, 2
      // Predicated region
      $region17: #{tpu_custom_call.1} parent=5 // pred_check
        %p130 = pneg %p129
      $region18: #{tpu_custom_call.1} parent=5 // pred_check_branch
        %132 = sbr.rel (%p130) target = $region20
      $region19: #{tpu_custom_call.1} parent=5 // pred_region
        // Predicated region
        $region21: #{tpu_custom_call.1} parent=19 // pred_check
          %p133 = pneg %p32
        $region22: #{tpu_custom_call.1} parent=19 // pred_check_branch
          %135 = sbr.rel (%p133) target = $region24
        $region23: #{tpu_custom_call.1} parent=19 // pred_region
          %s136 = smul.u32 32, %s12
          %p137 = scmp.lt.s32.totalorder %s136, 63
          %s138 = scalar_select %p137, %s136, 63
          %s139 = smul.addr %s138, 8
          %s140 = scalar_lea.vmem %s0, %s139
          %s141 = smul.u32 32, %s12
        $region24: #{tpu_custom_call.1} parent=19 // pred_fallthru
          _
        // Predicated region
        $region25: #{tpu_custom_call.1} parent=19 // pred_check
          %p142 = pneg %p58
        $region26: #{tpu_custom_call.1} parent=19 // pred_check_branch
          %144 = sbr.rel (%p142) target = $region28
        $region27: #{tpu_custom_call.1} parent=19 // pred_region
          %s145 = smul.u32 32, %s12
          %p146 = scmp.lt.s32.totalorder %s145, 63
          %s147 = scalar_select %p146, %s145, 63
          %s148 = smul.addr %s147, 8
          %s149 = scalar_lea.vmem %s1, %s148
          %s150 = smul.u32 32, %s12
        $region28: #{tpu_custom_call.1} parent=19 // pred_fallthru
          _
      $region20: #{tpu_custom_call.1} parent=5 // pred_fallthru
        _
      %p151 = scmp.le.s32.totalorder 1, %s12
      %p152 = scmp.lt.s32.totalorder %s12, 3
      %p153 = pnand %p151, %p152
      %p154 = pneg %p153
      // Predicated region
      $region29: #{tpu_custom_call.1} parent=5 // pred_check
        _
      $region30: #{tpu_custom_call.1} parent=5 // pred_check_branch
        %156 = sbr.rel (%p153) target = $region32
      $region31: #{tpu_custom_call.1} parent=5 // pred_region
        %s157 = ssub.s32 %s12, 1
        %s158 = smul.u32 32, %s17
        %p159 = scmp.lt.s32.totalorder %s158, 63
        %s160 = scalar_select %p159, %s158, 63
        %s161 = smul.addr %s160, 8
        %s162 = scalar_lea.vmem %s0, %s161
        %p163 = pneg %p38
        %p164 = pneg %p35
        %s165 = smul.u32 32, %s17
        %p166 = scmp.lt.s32.totalorder %s165, 63
        %s167 = scalar_select %p166, %s165, 63
        %s168 = smul.addr %s167, 8
        %s169 = scalar_lea.vmem %s1, %s168
        %p170 = pneg %p64
        %p171 = pneg %p61
        %p172 = pneg %p85
        %p173 = pneg %p82
        %p174 = pneg %p111
        %p175 = pneg %p108
        %s176 = sand.u32 %s98, 1
        %s177 = scalar_lea.sflag [#allocation3], %s176
        %s178 = sand.u32 %s98, 1
        %s179 = smul.addr %s178, 512
        %s180 = scalar_lea.vmem [#allocation2], %s179
        %s181 = smul.u32 32, %s17
        %p182 = scmp.lt.s32.totalorder %s181, 63
        %s183 = scalar_select %p182, %s181, 63
        %s184 = smul.addr %s183, 8
        %s185 = scalar_lea.vmem %s0, %s184
        %s186 = smul.u32 32, %s17
        %s187 = smul.u32 32, %s17
        %p188 = scmp.lt.s32.totalorder %s187, 63
        %s189 = scalar_select %p188, %s187, 63
        %s190 = smul.addr %s189, 8
        %s191 = scalar_lea.vmem %s1, %s190
        %s192 = smul.u32 32, %s17
        %s193 = smul.u32 32, %s17
        %v194 = vld [vmem:[%s185] sm:$0xff]
        %v195 = vld [vmem:[%s185 + $0x8] sm:$0xff]
        %v196 = vld [vmem:[%s185 + $0x10] sm:$0xff]
        %v197 = vld [vmem:[%s185 + $0x18] sm:$0xff]
        %v198 = vld [vmem:[%s185 + $0x20] sm:$0xff]
        %v199 = vld [vmem:[%s185 + $0x28] sm:$0xff]
        %v200 = vld [vmem:[%s185 + $0x30] sm:$0xff]
        %v201 = vld [vmem:[%s185 + $0x38] sm:$0xff]
        %v202 = vld [vmem:[%s185 + $0x40] sm:$0xff]
        %v203 = vld [vmem:[%s185 + $0x48] sm:$0xff]
        %v204 = vld [vmem:[%s185 + $0x50] sm:$0xff]
        %v205 = vld [vmem:[%s185 + $0x58] sm:$0xff]
        %v206 = vld [vmem:[%s185 + $0x60] sm:$0xff]
        %v207 = vld [vmem:[%s185 + $0x68] sm:$0xff]
        %v208 = vld [vmem:[%s185 + $0x70] sm:$0xff]
        %v209 = vld [vmem:[%s185 + $0x78] sm:$0xff]
        %v210 = vld [vmem:[%s185 + $0x80] sm:$0xff]
        %v211 = vld [vmem:[%s185 + $0x88] sm:$0xff]
        %v212 = vld [vmem:[%s185 + $0x90] sm:$0xff]
        %v213 = vld [vmem:[%s185 + $0x98] sm:$0xff]
        %v214 = vld [vmem:[%s185 + $0xa0] sm:$0xff]
        %v215 = vld [vmem:[%s185 + $0xa8] sm:$0xff]
        %v216 = vld [vmem:[%s185 + $0xb0] sm:$0xff]
        %v217 = vld [vmem:[%s185 + $0xb8] sm:$0xff]
        %v218 = vld [vmem:[%s185 + $0xc0] sm:$0xff]
        %v219 = vld [vmem:[%s185 + $0xc8] sm:$0xff]
        %v220 = vld [vmem:[%s185 + $0xd0] sm:$0xff]
        %v221 = vld [vmem:[%s185 + $0xd8] sm:$0xff]
        %v222 = vld [vmem:[%s185 + $0xe0] sm:$0xff]
        %v223 = vld [vmem:[%s185 + $0xe8] sm:$0xff]
        %v224 = vld [vmem:[%s185 + $0xf0] sm:$0xff]
        %v225 = vld [vmem:[%s185 + $0xf8] sm:$0xff]
        %v226 = vlaneseq
        %v227 = vand.u32 %v226, 127
        %228 = vset.pattern.permute.xlu0 0
        %229 = vperm.xlu0 %228, %v194
        %v230 = vpop.permute.xlu0 %229
        %231 = vset.pattern.permute.xlu0 0
        %232 = vperm.xlu0 %231, %v195
        %v233 = vpop.permute.xlu0 %232
        %234 = vset.pattern.permute.xlu0 0
        %235 = vperm.xlu0 %234, %v196
        %v236 = vpop.permute.xlu0 %235
        %237 = vset.pattern.permute.xlu0 0
        %238 = vperm.xlu0 %237, %v197
        %v239 = vpop.permute.xlu0 %238
        %240 = vset.pattern.permute.xlu0 0
        %241 = vperm.xlu0 %240, %v198
        %v242 = vpop.permute.xlu0 %241
        %243 = vset.pattern.permute.xlu0 0
        %244 = vperm.xlu0 %243, %v199
        %v245 = vpop.permute.xlu0 %244
        %246 = vset.pattern.permute.xlu0 0
        %247 = vperm.xlu0 %246, %v200
        %v248 = vpop.permute.xlu0 %247
        %249 = vset.pattern.permute.xlu0 0
        %250 = vperm.xlu0 %249, %v201
        %v251 = vpop.permute.xlu0 %250
        %252 = vset.pattern.permute.xlu0 0
        %253 = vperm.xlu0 %252, %v202
        %v254 = vpop.permute.xlu0 %253
        %255 = vset.pattern.permute.xlu0 0
        %256 = vperm.xlu0 %255, %v203
        %v257 = vpop.permute.xlu0 %256
        %258 = vset.pattern.permute.xlu0 0
        %259 = vperm.xlu0 %258, %v204
        %v260 = vpop.permute.xlu0 %259
        %261 = vset.pattern.permute.xlu0 0
        %262 = vperm.xlu0 %261, %v205
        %v263 = vpop.permute.xlu0 %262
        %264 = vset.pattern.permute.xlu0 0
        %265 = vperm.xlu0 %264, %v206
        %v266 = vpop.permute.xlu0 %265
        %267 = vset.pattern.permute.xlu0 0
        %268 = vperm.xlu0 %267, %v207
        %v269 = vpop.permute.xlu0 %268
        %270 = vset.pattern.permute.xlu0 0
        %271 = vperm.xlu0 %270, %v208
        %v272 = vpop.permute.xlu0 %271
        %273 = vset.pattern.permute.xlu0 0
        %274 = vperm.xlu0 %273, %v209
        %v275 = vpop.permute.xlu0 %274
        %276 = vset.pattern.permute.xlu0 0
        %277 = vperm.xlu0 %276, %v210
        %v278 = vpop.permute.xlu0 %277
        %279 = vset.pattern.permute.xlu0 0
        %280 = vperm.xlu0 %279, %v211
        %v281 = vpop.permute.xlu0 %280
        %282 = vset.pattern.permute.xlu0 0
        %283 = vperm.xlu0 %282, %v212
        %v284 = vpop.permute.xlu0 %283
        %285 = vset.pattern.permute.xlu0 0
        %286 = vperm.xlu0 %285, %v213
        %v287 = vpop.permute.xlu0 %286
        %288 = vset.pattern.permute.xlu0 0
        %289 = vperm.xlu0 %288, %v214
        %v290 = vpop.permute.xlu0 %289
        %291 = vset.pattern.permute.xlu0 0
        %292 = vperm.xlu0 %291, %v215
        %v293 = vpop.permute.xlu0 %292
        %294 = vset.pattern.permute.xlu0 0
        %295 = vperm.xlu0 %294, %v216
        %v296 = vpop.permute.xlu0 %295
        %297 = vset.pattern.permute.xlu0 0
        %298 = vperm.xlu0 %297, %v217
        %v299 = vpop.permute.xlu0 %298
        %300 = vset.pattern.permute.xlu0 0
        %301 = vperm.xlu0 %300, %v218
        %v302 = vpop.permute.xlu0 %301
        %303 = vset.pattern.permute.xlu0 0
        %304 = vperm.xlu0 %303, %v219
        %v305 = vpop.permute.xlu0 %304
        %306 = vset.pattern.permute.xlu0 0
        %307 = vperm.xlu0 %306, %v220
        %v308 = vpop.permute.xlu0 %307
        %309 = vset.pattern.permute.xlu0 0
        %310 = vperm.xlu0 %309, %v221
        %v311 = vpop.permute.xlu0 %310
        %312 = vset.pattern.permute.xlu0 0
        %313 = vperm.xlu0 %312, %v222
        %v314 = vpop.permute.xlu0 %313
        %315 = vset.pattern.permute.xlu0 0
        %316 = vperm.xlu0 %315, %v223
        %v317 = vpop.permute.xlu0 %316
        %318 = vset.pattern.permute.xlu0 0
        %319 = vperm.xlu0 %318, %v224
        %v320 = vpop.permute.xlu0 %319
        %321 = vset.pattern.permute.xlu0 0
        %322 = vperm.xlu0 %321, %v225
        %v323 = vpop.permute.xlu0 %322
        %vm324 = vcmp.eq.s32.totalorder %v230, %v227
        %vm325 = vcmp.eq.s32.totalorder %v233, %v227
        %vm326 = vcmp.eq.s32.totalorder %v236, %v227
        %vm327 = vcmp.eq.s32.totalorder %v239, %v227
        %vm328 = vcmp.eq.s32.totalorder %v242, %v227
        %vm329 = vcmp.eq.s32.totalorder %v245, %v227
        %vm330 = vcmp.eq.s32.totalorder %v248, %v227
        %vm331 = vcmp.eq.s32.totalorder %v251, %v227
        %vm332 = vcmp.eq.s32.totalorder %v254, %v227
        %vm333 = vcmp.eq.s32.totalorder %v257, %v227
        %vm334 = vcmp.eq.s32.totalorder %v260, %v227
        %vm335 = vcmp.eq.s32.totalorder %v263, %v227
        %vm336 = vcmp.eq.s32.totalorder %v266, %v227
        %vm337 = vcmp.eq.s32.totalorder %v269, %v227
        %vm338 = vcmp.eq.s32.totalorder %v272, %v227
        %vm339 = vcmp.eq.s32.totalorder %v275, %v227
        %vm340 = vcmp.eq.s32.totalorder %v278, %v227
        %vm341 = vcmp.eq.s32.totalorder %v281, %v227
        %vm342 = vcmp.eq.s32.totalorder %v284, %v227
        %vm343 = vcmp.eq.s32.totalorder %v287, %v227
        %vm344 = vcmp.eq.s32.totalorder %v290, %v227
        %vm345 = vcmp.eq.s32.totalorder %v293, %v227
        %vm346 = vcmp.eq.s32.totalorder %v296, %v227
        %vm347 = vcmp.eq.s32.totalorder %v299, %v227
        %vm348 = vcmp.eq.s32.totalorder %v302, %v227
        %vm349 = vcmp.eq.s32.totalorder %v305, %v227
        %vm350 = vcmp.eq.s32.totalorder %v308, %v227
        %vm351 = vcmp.eq.s32.totalorder %v311, %v227
        %vm352 = vcmp.eq.s32.totalorder %v314, %v227
        %vm353 = vcmp.eq.s32.totalorder %v317, %v227
        %vm354 = vcmp.eq.s32.totalorder %v320, %v227
        %vm355 = vcmp.eq.s32.totalorder %v323, %v227
        %v356 = vsel %vm324, 1, 0
        %v357 = vsel %vm325, 1, 0
        %v358 = vsel %vm326, 1, 0
        %v359 = vsel %vm327, 1, 0
        %v360 = vsel %vm328, 1, 0
        %v361 = vsel %vm329, 1, 0
        %v362 = vsel %vm330, 1, 0
        %v363 = vsel %vm331, 1, 0
        %v364 = vsel %vm332, 1, 0
        %v365 = vsel %vm333, 1, 0
        %v366 = vsel %vm334, 1, 0
        %v367 = vsel %vm335, 1, 0
        %v368 = vsel %vm336, 1, 0
        %v369 = vsel %vm337, 1, 0
        %v370 = vsel %vm338, 1, 0
        %v371 = vsel %vm339, 1, 0
        %v372 = vsel %vm340, 1, 0
        %v373 = vsel %vm341, 1, 0
        %v374 = vsel %vm342, 1, 0
        %v375 = vsel %vm343, 1, 0
        %v376 = vsel %vm344, 1, 0
        %v377 = vsel %vm345, 1, 0
        %v378 = vsel %vm346, 1, 0
        %v379 = vsel %vm347, 1, 0
        %v380 = vsel %vm348, 1, 0
        %v381 = vsel %vm349, 1, 0
        %v382 = vsel %vm350, 1, 0
        %v383 = vsel %vm351, 1, 0
        %v384 = vsel %vm352, 1, 0
        %v385 = vsel %vm353, 1, 0
        %v386 = vsel %vm354, 1, 0
        %v387 = vsel %vm355, 1, 0
        %v388 = vcvt.s32.f32 %v356
        %v389 = vcvt.s32.f32 %v357
        %v390 = vcvt.s32.f32 %v358
        %v391 = vcvt.s32.f32 %v359
        %v392 = vcvt.s32.f32 %v360
        %v393 = vcvt.s32.f32 %v361
        %v394 = vcvt.s32.f32 %v362
        %v395 = vcvt.s32.f32 %v363
        %v396 = vcvt.s32.f32 %v364
        %v397 = vcvt.s32.f32 %v365
        %v398 = vcvt.s32.f32 %v366
        %v399 = vcvt.s32.f32 %v367
        %v400 = vcvt.s32.f32 %v368
        %v401 = vcvt.s32.f32 %v369
        %v402 = vcvt.s32.f32 %v370
        %v403 = vcvt.s32.f32 %v371
        %v404 = vcvt.s32.f32 %v372
        %v405 = vcvt.s32.f32 %v373
        %v406 = vcvt.s32.f32 %v374
        %v407 = vcvt.s32.f32 %v375
        %v408 = vcvt.s32.f32 %v376
        %v409 = vcvt.s32.f32 %v377
        %v410 = vcvt.s32.f32 %v378
        %v411 = vcvt.s32.f32 %v379
        %v412 = vcvt.s32.f32 %v380
        %v413 = vcvt.s32.f32 %v381
        %v414 = vcvt.s32.f32 %v382
        %v415 = vcvt.s32.f32 %v383
        %v416 = vcvt.s32.f32 %v384
        %v417 = vcvt.s32.f32 %v385
        %v418 = vcvt.s32.f32 %v386
        %v419 = vcvt.s32.f32 %v387
        %v420 = vld [vmem:[%s191] sm:$0xff]
        %v421 = vld [vmem:[%s191 + $0x8] sm:$0xff]
        %v422 = vld [vmem:[%s191 + $0x10] sm:$0xff]
        %v423 = vld [vmem:[%s191 + $0x18] sm:$0xff]
        %v424 = vld [vmem:[%s191 + $0x20] sm:$0xff]
        %v425 = vld [vmem:[%s191 + $0x28] sm:$0xff]
        %v426 = vld [vmem:[%s191 + $0x30] sm:$0xff]
        %v427 = vld [vmem:[%s191 + $0x38] sm:$0xff]
        %v428 = vld [vmem:[%s191 + $0x40] sm:$0xff]
        %v429 = vld [vmem:[%s191 + $0x48] sm:$0xff]
        %v430 = vld [vmem:[%s191 + $0x50] sm:$0xff]
        %v431 = vld [vmem:[%s191 + $0x58] sm:$0xff]
        %v432 = vld [vmem:[%s191 + $0x60] sm:$0xff]
        %v433 = vld [vmem:[%s191 + $0x68] sm:$0xff]
        %v434 = vld [vmem:[%s191 + $0x70] sm:$0xff]
        %v435 = vld [vmem:[%s191 + $0x78] sm:$0xff]
        %v436 = vld [vmem:[%s191 + $0x80] sm:$0xff]
        %v437 = vld [vmem:[%s191 + $0x88] sm:$0xff]
        %v438 = vld [vmem:[%s191 + $0x90] sm:$0xff]
        %v439 = vld [vmem:[%s191 + $0x98] sm:$0xff]
        %v440 = vld [vmem:[%s191 + $0xa0] sm:$0xff]
        %v441 = vld [vmem:[%s191 + $0xa8] sm:$0xff]
        %v442 = vld [vmem:[%s191 + $0xb0] sm:$0xff]
        %v443 = vld [vmem:[%s191 + $0xb8] sm:$0xff]
        %v444 = vld [vmem:[%s191 + $0xc0] sm:$0xff]
        %v445 = vld [vmem:[%s191 + $0xc8] sm:$0xff]
        %v446 = vld [vmem:[%s191 + $0xd0] sm:$0xff]
        %v447 = vld [vmem:[%s191 + $0xd8] sm:$0xff]
        %v448 = vld [vmem:[%s191 + $0xe0] sm:$0xff]
        %v449 = vld [vmem:[%s191 + $0xe8] sm:$0xff]
        %v450 = vld [vmem:[%s191 + $0xf0] sm:$0xff]
        %v451 = vld [vmem:[%s191 + $0xf8] sm:$0xff]
        %484 = vrot.lane.b32.xlu0 %v420, 32
        %v485 = vpop.permute.xlu0 %484
        %486 = vrot.lane.b32.xlu0 %v421, 32
        %v487 = vpop.permute.xlu0 %486
        %488 = vrot.lane.b32.xlu0 %v422, 32
        %v489 = vpop.permute.xlu0 %488
        %490 = vrot.lane.b32.xlu0 %v423, 32
        %v491 = vpop.permute.xlu0 %490
        %492 = vrot.lane.b32.xlu0 %v424, 32
        %v493 = vpop.permute.xlu0 %492
        %494 = vrot.lane.b32.xlu0 %v425, 32
        %v495 = vpop.permute.xlu0 %494
        %496 = vrot.lane.b32.xlu0 %v426, 32
        %v497 = vpop.permute.xlu0 %496
        %498 = vrot.lane.b32.xlu0 %v427, 32
        %v499 = vpop.permute.xlu0 %498
        %500 = vrot.lane.b32.xlu0 %v428, 32
        %v501 = vpop.permute.xlu0 %500
        %502 = vrot.lane.b32.xlu0 %v429, 32
        %v503 = vpop.permute.xlu0 %502
        %504 = vrot.lane.b32.xlu0 %v430, 32
        %v505 = vpop.permute.xlu0 %504
        %506 = vrot.lane.b32.xlu0 %v431, 32
        %v507 = vpop.permute.xlu0 %506
        %508 = vrot.lane.b32.xlu0 %v432, 32
        %v509 = vpop.permute.xlu0 %508
        %510 = vrot.lane.b32.xlu0 %v433, 32
        %v511 = vpop.permute.xlu0 %510
        %512 = vrot.lane.b32.xlu0 %v434, 32
        %v513 = vpop.permute.xlu0 %512
        %514 = vrot.lane.b32.xlu0 %v435, 32
        %v515 = vpop.permute.xlu0 %514
        %516 = vrot.lane.b32.xlu0 %v436, 32
        %v517 = vpop.permute.xlu0 %516
        %518 = vrot.lane.b32.xlu0 %v437, 32
        %v519 = vpop.permute.xlu0 %518
        %520 = vrot.lane.b32.xlu0 %v438, 32
        %v521 = vpop.permute.xlu0 %520
        %522 = vrot.lane.b32.xlu0 %v439, 32
        %v523 = vpop.permute.xlu0 %522
        %524 = vrot.lane.b32.xlu0 %v440, 32
        %v525 = vpop.permute.xlu0 %524
        %526 = vrot.lane.b32.xlu0 %v441, 32
        %v527 = vpop.permute.xlu0 %526
        %528 = vrot.lane.b32.xlu0 %v442, 32
        %v529 = vpop.permute.xlu0 %528
        %530 = vrot.lane.b32.xlu0 %v443, 32
        %v531 = vpop.permute.xlu0 %530
        %532 = vrot.lane.b32.xlu0 %v444, 32
        %v533 = vpop.permute.xlu0 %532
        %534 = vrot.lane.b32.xlu0 %v445, 32
        %v535 = vpop.permute.xlu0 %534
        %536 = vrot.lane.b32.xlu0 %v446, 32
        %v537 = vpop.permute.xlu0 %536
        %538 = vrot.lane.b32.xlu0 %v447, 32
        %v539 = vpop.permute.xlu0 %538
        %540 = vrot.lane.b32.xlu0 %v448, 32
        %v541 = vpop.permute.xlu0 %540
        %542 = vrot.lane.b32.xlu0 %v449, 32
        %v543 = vpop.permute.xlu0 %542
        %544 = vrot.lane.b32.xlu0 %v450, 32
        %v545 = vpop.permute.xlu0 %544
        %546 = vrot.lane.b32.xlu0 %v451, 32
        %v547 = vpop.permute.xlu0 %546
        %vm580 = vcmask 261120
        %v581 = vsel %vm580, %v388, %v485
        %v582 = vsel %vm580, %v389, %v487
        %v583 = vsel %vm580, %v390, %v489
        %v584 = vsel %vm580, %v391, %v491
        %v585 = vsel %vm580, %v392, %v493
        %v586 = vsel %vm580, %v393, %v495
        %v587 = vsel %vm580, %v394, %v497
        %v588 = vsel %vm580, %v395, %v499
        %v589 = vsel %vm580, %v396, %v501
        %v590 = vsel %vm580, %v397, %v503
        %v591 = vsel %vm580, %v398, %v505
        %v592 = vsel %vm580, %v399, %v507
        %v593 = vsel %vm580, %v400, %v509
        %v594 = vsel %vm580, %v401, %v511
        %v595 = vsel %vm580, %v402, %v513
        %v596 = vsel %vm580, %v403, %v515
        %v597 = vsel %vm580, %v404, %v517
        %v598 = vsel %vm580, %v405, %v519
        %v599 = vsel %vm580, %v406, %v521
        %v600 = vsel %vm580, %v407, %v523
        %v601 = vsel %vm580, %v408, %v525
        %v602 = vsel %vm580, %v409, %v527
        %v603 = vsel %vm580, %v410, %v529
        %v604 = vsel %vm580, %v411, %v531
        %v605 = vsel %vm580, %v412, %v533
        %v606 = vsel %vm580, %v413, %v535
        %v607 = vsel %vm580, %v414, %v537
        %v608 = vsel %vm580, %v415, %v539
        %v609 = vsel %vm580, %v416, %v541
        %v610 = vsel %vm580, %v417, %v543
        %v611 = vsel %vm580, %v418, %v545
        %v612 = vsel %vm580, %v419, %v547
        %vm613 = vcmask 326656
        %v614 = vsel %vm613, %v581, 1.0
        %v615 = vsel %vm613, %v582, 1.0
        %v616 = vsel %vm613, %v583, 1.0
        %v617 = vsel %vm613, %v584, 1.0
        %v618 = vsel %vm613, %v585, 1.0
        %v619 = vsel %vm613, %v586, 1.0
        %v620 = vsel %vm613, %v587, 1.0
        %v621 = vsel %vm613, %v588, 1.0
        %v622 = vsel %vm613, %v589, 1.0
        %v623 = vsel %vm613, %v590, 1.0
        %v624 = vsel %vm613, %v591, 1.0
        %v625 = vsel %vm613, %v592, 1.0
        %v626 = vsel %vm613, %v593, 1.0
        %v627 = vsel %vm613, %v594, 1.0
        %v628 = vsel %vm613, %v595, 1.0
        %v629 = vsel %vm613, %v596, 1.0
        %v630 = vsel %vm613, %v597, 1.0
        %v631 = vsel %vm613, %v598, 1.0
        %v632 = vsel %vm613, %v599, 1.0
        %v633 = vsel %vm613, %v600, 1.0
        %v634 = vsel %vm613, %v601, 1.0
        %v635 = vsel %vm613, %v602, 1.0
        %v636 = vsel %vm613, %v603, 1.0
        %v637 = vsel %vm613, %v604, 1.0
        %v638 = vsel %vm613, %v605, 1.0
        %v639 = vsel %vm613, %v606, 1.0
        %v640 = vsel %vm613, %v607, 1.0
        %v641 = vsel %vm613, %v608, 1.0
        %v642 = vsel %vm613, %v609, 1.0
        %v643 = vsel %vm613, %v610, 1.0
        %v644 = vsel %vm613, %v611, 1.0
        %v645 = vsel %vm613, %v612, 1.0
        %vm646 = vcmask 334848
        %v647 = vsel %vm646, %v614, 0.0
        %v648 = vsel %vm646, %v615, 0.0
        %v649 = vsel %vm646, %v616, 0.0
        %v650 = vsel %vm646, %v617, 0.0
        %v651 = vsel %vm646, %v618, 0.0
        %v652 = vsel %vm646, %v619, 0.0
        %v653 = vsel %vm646, %v620, 0.0
        %v654 = vsel %vm646, %v621, 0.0
        %v655 = vsel %vm646, %v622, 0.0
        %v656 = vsel %vm646, %v623, 0.0
        %v657 = vsel %vm646, %v624, 0.0
        %v658 = vsel %vm646, %v625, 0.0
        %v659 = vsel %vm646, %v626, 0.0
        %v660 = vsel %vm646, %v627, 0.0
        %v661 = vsel %vm646, %v628, 0.0
        %v662 = vsel %vm646, %v629, 0.0
        %v663 = vsel %vm646, %v630, 0.0
        %v664 = vsel %vm646, %v631, 0.0
        %v665 = vsel %vm646, %v632, 0.0
        %v666 = vsel %vm646, %v633, 0.0
        %v667 = vsel %vm646, %v634, 0.0
        %v668 = vsel %vm646, %v635, 0.0
        %v669 = vsel %vm646, %v636, 0.0
        %v670 = vsel %vm646, %v637, 0.0
        %v671 = vsel %vm646, %v638, 0.0
        %v672 = vsel %vm646, %v639, 0.0
        %v673 = vsel %vm646, %v640, 0.0
        %v674 = vsel %vm646, %v641, 0.0
        %v675 = vsel %vm646, %v642, 0.0
        %v676 = vsel %vm646, %v643, 0.0
        %v677 = vsel %vm646, %v644, 0.0
        %v678 = vsel %vm646, %v645, 0.0
        %v679 = vld [vmem:[%s2] sm:$0xff]
        %v680 = vld [vmem:[%s2 + $0x8] sm:$0xff]
        %v681 = vld [vmem:[%s2 + $0x10] sm:$0xff]
        %v682 = vld [vmem:[%s2 + $0x18] sm:$0xff]
        %v683 = vld [vmem:[%s2 + $0x20] sm:$0xff]
        %v684 = vld [vmem:[%s2 + $0x28] sm:$0xff]
        %v685 = vld [vmem:[%s2 + $0x30] sm:$0xff]
        %v686 = vld [vmem:[%s2 + $0x38] sm:$0xff]
        %v687 = vld [vmem:[%s2 + $0x40] sm:$0xff]
        %v688 = vld [vmem:[%s2 + $0x48] sm:$0xff]
        %v689 = vld [vmem:[%s2 + $0x50] sm:$0xff]
        %v690 = vld [vmem:[%s2 + $0x58] sm:$0xff]
        %vm691 = vcmask 392192
        %v693 = vsel %vm691, %v647, 0
        %v696 = vsel %vm691, %v648, 0
        %v699 = vsel %vm691, %v649, 0
        %v702 = vsel %vm691, %v650, 0
        %v705 = vsel %vm691, %v651, 0
        %v708 = vsel %vm691, %v652, 0
        %v711 = vsel %vm691, %v653, 0
        %v714 = vsel %vm691, %v654, 0
        %v717 = vsel %vm691, %v655, 0
        %v720 = vsel %vm691, %v656, 0
        %v723 = vsel %vm691, %v657, 0
        %v726 = vsel %vm691, %v658, 0
        %v729 = vsel %vm691, %v659, 0
        %v732 = vsel %vm691, %v660, 0
        %v735 = vsel %vm691, %v661, 0
        %v738 = vsel %vm691, %v662, 0
        %v741 = vsel %vm691, %v663, 0
        %v744 = vsel %vm691, %v664, 0
        %v747 = vsel %vm691, %v665, 0
        %v750 = vsel %vm691, %v666, 0
        %v753 = vsel %vm691, %v667, 0
        %v756 = vsel %vm691, %v668, 0
        %v759 = vsel %vm691, %v669, 0
        %v762 = vsel %vm691, %v670, 0
        %v765 = vsel %vm691, %v671, 0
        %v768 = vsel %vm691, %v672, 0
        %v771 = vsel %vm691, %v673, 0
        %v774 = vsel %vm691, %v674, 0
        %v777 = vsel %vm691, %v675, 0
        %v780 = vsel %vm691, %v676, 0
        %v783 = vsel %vm691, %v677, 0
        %v786 = vsel %vm691, %v678, 0
        %788 = vmatprep.subr.mxu0 0.0
        %789 = vmatpush1.msra.mxu0 0.0
        %790 = vmatprep.subr.mxu0 0.0
        %791 = vmatpush1.msra.mxu0 0.0
        %792 = vmatprep.subr.mxu0 0.0
        %793 = vmatpush1.msra.mxu0 0.0
        %794 = vmatprep.subr.mxu0 0.0
        %795 = vmatpush1.msra.mxu0 0.0
        %796 = vmatprep.subr.mxu0 0.0
        %797 = vmatpush1.msra.mxu0 0.0
        %798 = vmatprep.subr.mxu0 0.0
        %799 = vmatpush1.msra.mxu0 0.0
        %800 = vmatprep.subr.mxu0 0.0
        %801 = vmatpush1.msra.mxu0 0.0
        %802 = vmatprep.subr.mxu0 0.0
        %803 = vmatpush1.msra.mxu0 0.0
        %804 = vmatprep.subr.mxu0 0.0
        %805 = vmatpush1.msra.mxu0 0.0
        %806 = vmatprep.subr.mxu0 0.0
        %807 = vmatpush1.msra.mxu0 0.0
        %v808 = vand.u32 %v690, 4294901760
        %809 = vmatprep.subr.mxu0 %v808
        %v810 = vand.u32 %v689, 4294901760
        %811 = vmatpush1.msra.mxu0 %v810
        %v812 = vand.u32 %v688, 4294901760
        %813 = vmatprep.subr.mxu0 %v812
        %v814 = vand.u32 %v687, 4294901760
        %815 = vmatpush1.msra.mxu0 %v814
        %v816 = vand.u32 %v686, 4294901760
        %817 = vmatprep.subr.mxu0 %v816
        %v818 = vand.u32 %v685, 4294901760
        %819 = vmatpush1.msra.mxu0 %v818
        %v820 = vand.u32 %v684, 4294901760
        %821 = vmatprep.subr.mxu0 %v820
        %v822 = vand.u32 %v683, 4294901760
        %823 = vmatpush1.msra.mxu0 %v822
        %v824 = vand.u32 %v682, 4294901760
        %825 = vmatprep.subr.mxu0 %v824
        %v826 = vand.u32 %v681, 4294901760
        %827 = vmatpush1.msra.mxu0 %v826
        %v828 = vand.u32 %v680, 4294901760
        %829 = vmatprep.subr.mxu0 %v828
        %v830 = vand.u32 %v679, 4294901760
        %831 = vmatpush1.msra.mxu0 %v830
        %832 = vmatprep.subr.mxu0 0.0
        %833 = vmatpush2.msra.mxu0 0.0
        %834 = vmatprep.subr.mxu0 0.0
        %835 = vmatpush2.msra.mxu0 0.0
        %836 = vmatprep.subr.mxu0 0.0
        %837 = vmatpush2.msra.mxu0 0.0
        %838 = vmatprep.subr.mxu0 0.0
        %839 = vmatpush2.msra.mxu0 0.0
        %840 = vmatprep.subr.mxu0 0.0
        %841 = vmatpush2.msra.mxu0 0.0
        %842 = vmatprep.subr.mxu0 0.0
        %843 = vmatpush2.msra.mxu0 0.0
        %844 = vmatprep.subr.mxu0 0.0
        %845 = vmatpush2.msra.mxu0 0.0
        %846 = vmatprep.subr.mxu0 0.0
        %847 = vmatpush2.msra.mxu0 0.0
        %848 = vmatprep.subr.mxu0 0.0
        %849 = vmatpush2.msra.mxu0 0.0
        %850 = vmatprep.subr.mxu0 0.0
        %851 = vmatpush2.msra.mxu0 0.0
        %852 = vmatprep.subr.mxu0 0.0
        %853 = vmatpush2.msra.mxu0 0.0
        %854 = vmatprep.subr.mxu0 0.0
        %855 = vmatpush2.msra.mxu0 0.0
        %856 = vmatprep.subr.mxu0 0.0
        %857 = vmatpush2.msra.mxu0 0.0
        %858 = vmatprep.subr.mxu0 0.0
        %859 = vmatpush2.msra.mxu0 0.0
        %860 = vmatprep.subr.mxu0 0.0
        %861 = vmatpush2.msra.mxu0 0.0
        %862 = vmatprep.subr.mxu0 0.0
        %863 = vmatpush2.msra.mxu0 0.0
        %864 = vmatprep.mubr.f32.mxu0 0.0
        %v865 = vand.u32 %v693, 4294901760
        %v866 = vsub.f32 %v693, %v865
        %v867 = vand.u32 %v866, 4294901760
        %v868 = vsub.f32 %v866, %v867
        %v869 = vand.u32 %v868, 4294901760
        %870 = vmatmul.mubr.f32.gmra.mxu0 %v869
        %v871 = vpop.f32.mrf.mxu0
        %v872 = vadd.f32 0.0, %v871
        %v873 = vpop.f32.mrf.mxu0
        %v874 = vadd.f32 0.0, %v873
        %875 = vmatprep.mubr.f32.mxu0 0.0
        %v876 = vand.u32 %v696, 4294901760
        %v877 = vsub.f32 %v696, %v876
        %v878 = vand.u32 %v877, 4294901760
        %v879 = vsub.f32 %v877, %v878
        %v880 = vand.u32 %v879, 4294901760
        %881 = vmatmul.mubr.f32.gmra.mxu0 %v880
        %v882 = vpop.f32.mrf.mxu0
        %v883 = vadd.f32 0.0, %v882
        %v884 = vpop.f32.mrf.mxu0
        %v885 = vadd.f32 0.0, %v884
        %886 = vmatprep.mubr.f32.mxu0 0.0
        %v887 = vand.u32 %v699, 4294901760
        %v888 = vsub.f32 %v699, %v887
        %v889 = vand.u32 %v888, 4294901760
        %v890 = vsub.f32 %v888, %v889
        %v891 = vand.u32 %v890, 4294901760
        %892 = vmatmul.mubr.f32.gmra.mxu0 %v891
        %v893 = vpop.f32.mrf.mxu0
        %v894 = vadd.f32 0.0, %v893
        %v895 = vpop.f32.mrf.mxu0
        %v896 = vadd.f32 0.0, %v895
        %897 = vmatprep.mubr.f32.mxu0 0.0
        %v898 = vand.u32 %v702, 4294901760
        %v899 = vsub.f32 %v702, %v898
        %v900 = vand.u32 %v899, 4294901760
        %v901 = vsub.f32 %v899, %v900
        %v902 = vand.u32 %v901, 4294901760
        %903 = vmatmul.mubr.f32.gmra.mxu0 %v902
        %v904 = vpop.f32.mrf.mxu0
        %v905 = vadd.f32 0.0, %v904
        %v906 = vpop.f32.mrf.mxu0
        %v907 = vadd.f32 0.0, %v906
        %908 = vmatprep.mubr.f32.mxu0 0.0
        %v909 = vand.u32 %v705, 4294901760
        %v910 = vsub.f32 %v705, %v909
        %v911 = vand.u32 %v910, 4294901760
        %v912 = vsub.f32 %v910, %v911
        %v913 = vand.u32 %v912, 4294901760
        %914 = vmatmul.mubr.f32.gmra.mxu0 %v913
        %v915 = vpop.f32.mrf.mxu0
        %v916 = vadd.f32 0.0, %v915
        %v917 = vpop.f32.mrf.mxu0
        %v918 = vadd.f32 0.0, %v917
        %919 = vmatprep.mubr.f32.mxu0 0.0
        %v920 = vand.u32 %v708, 4294901760
        %v921 = vsub.f32 %v708, %v920
        %v922 = vand.u32 %v921, 4294901760
        %v923 = vsub.f32 %v921, %v922
        %v924 = vand.u32 %v923, 4294901760
        %925 = vmatmul.mubr.f32.gmra.mxu0 %v924
        %v926 = vpop.f32.mrf.mxu0
        %v927 = vadd.f32 0.0, %v926
        %v928 = vpop.f32.mrf.mxu0
        %v929 = vadd.f32 0.0, %v928
        %930 = vmatprep.mubr.f32.mxu0 0.0
        %v931 = vand.u32 %v711, 4294901760
        %v932 = vsub.f32 %v711, %v931
        %v933 = vand.u32 %v932, 4294901760
        %v934 = vsub.f32 %v932, %v933
        %v935 = vand.u32 %v934, 4294901760
        %936 = vmatmul.mubr.f32.gmra.mxu0 %v935
        %v937 = vpop.f32.mrf.mxu0
        %v938 = vadd.f32 0.0, %v937
        %v939 = vpop.f32.mrf.mxu0
        %v940 = vadd.f32 0.0, %v939
        %941 = vmatprep.mubr.f32.mxu0 0.0
        %v942 = vand.u32 %v714, 4294901760
        %v943 = vsub.f32 %v714, %v942
        %v944 = vand.u32 %v943, 4294901760
        %v945 = vsub.f32 %v943, %v944
        %v946 = vand.u32 %v945, 4294901760
        %947 = vmatmul.mubr.f32.gmra.mxu0 %v946
        %v948 = vpop.f32.mrf.mxu0
        %v949 = vadd.f32 0.0, %v948
        %v950 = vpop.f32.mrf.mxu0
        %v951 = vadd.f32 0.0, %v950
        %952 = vmatprep.mubr.f32.mxu0 0.0
        %v953 = vand.u32 %v717, 4294901760
        %v954 = vsub.f32 %v717, %v953
        %v955 = vand.u32 %v954, 4294901760
        %v956 = vsub.f32 %v954, %v955
        %v957 = vand.u32 %v956, 4294901760
        %958 = vmatmul.mubr.f32.gmra.mxu0 %v957
        %v959 = vpop.f32.mrf.mxu0
        %v960 = vadd.f32 0.0, %v959
        %v961 = vpop.f32.mrf.mxu0
        %v962 = vadd.f32 0.0, %v961
        %963 = vmatprep.mubr.f32.mxu0 0.0
        %v964 = vand.u32 %v720, 4294901760
        %v965 = vsub.f32 %v720, %v964
        %v966 = vand.u32 %v965, 4294901760
        %v967 = vsub.f32 %v965, %v966
        %v968 = vand.u32 %v967, 4294901760
        %969 = vmatmul.mubr.f32.gmra.mxu0 %v968
        %v970 = vpop.f32.mrf.mxu0
        %v971 = vadd.f32 0.0, %v970
        %v972 = vpop.f32.mrf.mxu0
        %v973 = vadd.f32 0.0, %v972
        %974 = vmatprep.mubr.f32.mxu0 0.0
        %v975 = vand.u32 %v723, 4294901760
        %v976 = vsub.f32 %v723, %v975
        %v977 = vand.u32 %v976, 4294901760
        %v978 = vsub.f32 %v976, %v977
        %v979 = vand.u32 %v978, 4294901760
        %980 = vmatmul.mubr.f32.gmra.mxu0 %v979
        %v981 = vpop.f32.mrf.mxu0
        %v982 = vadd.f32 0.0, %v981
        %v983 = vpop.f32.mrf.mxu0
        %v984 = vadd.f32 0.0, %v983
        %985 = vmatprep.mubr.f32.mxu0 0.0
        %v986 = vand.u32 %v726, 4294901760
        %v987 = vsub.f32 %v726, %v986
        %v988 = vand.u32 %v987, 4294901760
        %v989 = vsub.f32 %v987, %v988
        %v990 = vand.u32 %v989, 4294901760
        %991 = vmatmul.mubr.f32.gmra.mxu0 %v990
        %v992 = vpop.f32.mrf.mxu0
        %v993 = vadd.f32 0.0, %v992
        %v994 = vpop.f32.mrf.mxu0
        %v995 = vadd.f32 0.0, %v994
        %996 = vmatprep.mubr.f32.mxu0 0.0
        %v997 = vand.u32 %v729, 4294901760
        %v998 = vsub.f32 %v729, %v997
        %v999 = vand.u32 %v998, 4294901760
        %v1000 = vsub.f32 %v998, %v999
        %v1001 = vand.u32 %v1000, 4294901760
        %1002 = vmatmul.mubr.f32.gmra.mxu0 %v1001
        %v1003 = vpop.f32.mrf.mxu0
        %v1004 = vadd.f32 0.0, %v1003
        %v1005 = vpop.f32.mrf.mxu0
        %v1006 = vadd.f32 0.0, %v1005
        %1007 = vmatprep.mubr.f32.mxu0 0.0
        %v1008 = vand.u32 %v732, 4294901760
        %v1009 = vsub.f32 %v732, %v1008
        %v1010 = vand.u32 %v1009, 4294901760
        %v1011 = vsub.f32 %v1009, %v1010
        %v1012 = vand.u32 %v1011, 4294901760
        %1013 = vmatmul.mubr.f32.gmra.mxu0 %v1012
        %v1014 = vpop.f32.mrf.mxu0
        %v1015 = vadd.f32 0.0, %v1014
        %v1016 = vpop.f32.mrf.mxu0
        %v1017 = vadd.f32 0.0, %v1016
        %1018 = vmatprep.mubr.f32.mxu0 0.0
        %v1019 = vand.u32 %v735, 4294901760
        %v1020 = vsub.f32 %v735, %v1019
        %v1021 = vand.u32 %v1020, 4294901760
        %v1022 = vsub.f32 %v1020, %v1021
        %v1023 = vand.u32 %v1022, 4294901760
        %1024 = vmatmul.mubr.f32.gmra.mxu0 %v1023
        %v1025 = vpop.f32.mrf.mxu0
        %v1026 = vadd.f32 0.0, %v1025
        %v1027 = vpop.f32.mrf.mxu0
        %v1028 = vadd.f32 0.0, %v1027
        %1029 = vmatprep.mubr.f32.mxu0 0.0
        %v1030 = vand.u32 %v738, 4294901760
        %v1031 = vsub.f32 %v738, %v1030
        %v1032 = vand.u32 %v1031, 4294901760
        %v1033 = vsub.f32 %v1031, %v1032
        %v1034 = vand.u32 %v1033, 4294901760
        %1035 = vmatmul.mubr.f32.gmra.mxu0 %v1034
        %v1036 = vpop.f32.mrf.mxu0
        %v1037 = vadd.f32 0.0, %v1036
        %v1038 = vpop.f32.mrf.mxu0
        %v1039 = vadd.f32 0.0, %v1038
        %1040 = vmatprep.mubr.f32.mxu0 0.0
        %v1041 = vand.u32 %v741, 4294901760
        %v1042 = vsub.f32 %v741, %v1041
        %v1043 = vand.u32 %v1042, 4294901760
        %v1044 = vsub.f32 %v1042, %v1043
        %v1045 = vand.u32 %v1044, 4294901760
        %1046 = vmatmul.mubr.f32.gmra.mxu0 %v1045
        %v1047 = vpop.f32.mrf.mxu0
        %v1048 = vadd.f32 0.0, %v1047
        %v1049 = vpop.f32.mrf.mxu0
        %v1050 = vadd.f32 0.0, %v1049
        %1051 = vmatprep.mubr.f32.mxu0 0.0
        %v1052 = vand.u32 %v744, 4294901760
        %v1053 = vsub.f32 %v744, %v1052
        %v1054 = vand.u32 %v1053, 4294901760
        %v1055 = vsub.f32 %v1053, %v1054
        %v1056 = vand.u32 %v1055, 4294901760
        %1057 = vmatmul.mubr.f32.gmra.mxu0 %v1056
        %v1058 = vpop.f32.mrf.mxu0
        %v1059 = vadd.f32 0.0, %v1058
        %v1060 = vpop.f32.mrf.mxu0
        %v1061 = vadd.f32 0.0, %v1060
        %1062 = vmatprep.mubr.f32.mxu0 0.0
        %v1063 = vand.u32 %v747, 4294901760
        %v1064 = vsub.f32 %v747, %v1063
        %v1065 = vand.u32 %v1064, 4294901760
        %v1066 = vsub.f32 %v1064, %v1065
        %v1067 = vand.u32 %v1066, 4294901760
        %1068 = vmatmul.mubr.f32.gmra.mxu0 %v1067
        %v1069 = vpop.f32.mrf.mxu0
        %v1070 = vadd.f32 0.0, %v1069
        %v1071 = vpop.f32.mrf.mxu0
        %v1072 = vadd.f32 0.0, %v1071
        %1073 = vmatprep.mubr.f32.mxu0 0.0
        %v1074 = vand.u32 %v750, 4294901760
        %v1075 = vsub.f32 %v750, %v1074
        %v1076 = vand.u32 %v1075, 4294901760
        %v1077 = vsub.f32 %v1075, %v1076
        %v1078 = vand.u32 %v1077, 4294901760
        %1079 = vmatmul.mubr.f32.gmra.mxu0 %v1078
        %v1080 = vpop.f32.mrf.mxu0
        %v1081 = vadd.f32 0.0, %v1080
        %v1082 = vpop.f32.mrf.mxu0
        %v1083 = vadd.f32 0.0, %v1082
        %1084 = vmatprep.mubr.f32.mxu0 0.0
        %v1085 = vand.u32 %v753, 4294901760
        %v1086 = vsub.f32 %v753, %v1085
        %v1087 = vand.u32 %v1086, 4294901760
        %v1088 = vsub.f32 %v1086, %v1087
        %v1089 = vand.u32 %v1088, 4294901760
        %1090 = vmatmul.mubr.f32.gmra.mxu0 %v1089
        %v1091 = vpop.f32.mrf.mxu0
        %v1092 = vadd.f32 0.0, %v1091
        %v1093 = vpop.f32.mrf.mxu0
        %v1094 = vadd.f32 0.0, %v1093
        %1095 = vmatprep.mubr.f32.mxu0 0.0
        %v1096 = vand.u32 %v756, 4294901760
        %v1097 = vsub.f32 %v756, %v1096
        %v1098 = vand.u32 %v1097, 4294901760
        %v1099 = vsub.f32 %v1097, %v1098
        %v1100 = vand.u32 %v1099, 4294901760
        %1101 = vmatmul.mubr.f32.gmra.mxu0 %v1100
        %v1102 = vpop.f32.mrf.mxu0
        %v1103 = vadd.f32 0.0, %v1102
        %v1104 = vpop.f32.mrf.mxu0
        %v1105 = vadd.f32 0.0, %v1104
        %1106 = vmatprep.mubr.f32.mxu0 0.0
        %v1107 = vand.u32 %v759, 4294901760
        %v1108 = vsub.f32 %v759, %v1107
        %v1109 = vand.u32 %v1108, 4294901760
        %v1110 = vsub.f32 %v1108, %v1109
        %v1111 = vand.u32 %v1110, 4294901760
        %1112 = vmatmul.mubr.f32.gmra.mxu0 %v1111
        %v1113 = vpop.f32.mrf.mxu0
        %v1114 = vadd.f32 0.0, %v1113
        %v1115 = vpop.f32.mrf.mxu0
        %v1116 = vadd.f32 0.0, %v1115
        %1117 = vmatprep.mubr.f32.mxu0 0.0
        %v1118 = vand.u32 %v762, 4294901760
        %v1119 = vsub.f32 %v762, %v1118
        %v1120 = vand.u32 %v1119, 4294901760
        %v1121 = vsub.f32 %v1119, %v1120
        %v1122 = vand.u32 %v1121, 4294901760
        %1123 = vmatmul.mubr.f32.gmra.mxu0 %v1122
        %v1124 = vpop.f32.mrf.mxu0
        %v1125 = vadd.f32 0.0, %v1124
        %v1126 = vpop.f32.mrf.mxu0
        %v1127 = vadd.f32 0.0, %v1126
        %1128 = vmatprep.mubr.f32.mxu0 0.0
        %v1129 = vand.u32 %v765, 4294901760
        %v1130 = vsub.f32 %v765, %v1129
        %v1131 = vand.u32 %v1130, 4294901760
        %v1132 = vsub.f32 %v1130, %v1131
        %v1133 = vand.u32 %v1132, 4294901760
        %1134 = vmatmul.mubr.f32.gmra.mxu0 %v1133
        %v1135 = vpop.f32.mrf.mxu0
        %v1136 = vadd.f32 0.0, %v1135
        %v1137 = vpop.f32.mrf.mxu0
        %v1138 = vadd.f32 0.0, %v1137
        %1139 = vmatprep.mubr.f32.mxu0 0.0
        %v1140 = vand.u32 %v768, 4294901760
        %v1141 = vsub.f32 %v768, %v1140
        %v1142 = vand.u32 %v1141, 4294901760
        %v1143 = vsub.f32 %v1141, %v1142
        %v1144 = vand.u32 %v1143, 4294901760
        %1145 = vmatmul.mubr.f32.gmra.mxu0 %v1144
        %v1146 = vpop.f32.mrf.mxu0
        %v1147 = vadd.f32 0.0, %v1146
        %v1148 = vpop.f32.mrf.mxu0
        %v1149 = vadd.f32 0.0, %v1148
        %1150 = vmatprep.mubr.f32.mxu0 0.0
        %v1151 = vand.u32 %v771, 4294901760
        %v1152 = vsub.f32 %v771, %v1151
        %v1153 = vand.u32 %v1152, 4294901760
        %v1154 = vsub.f32 %v1152, %v1153
        %v1155 = vand.u32 %v1154, 4294901760
        %1156 = vmatmul.mubr.f32.gmra.mxu0 %v1155
        %v1157 = vpop.f32.mrf.mxu0
        %v1158 = vadd.f32 0.0, %v1157
        %v1159 = vpop.f32.mrf.mxu0
        %v1160 = vadd.f32 0.0, %v1159
        %1161 = vmatprep.mubr.f32.mxu0 0.0
        %v1162 = vand.u32 %v774, 4294901760
        %v1163 = vsub.f32 %v774, %v1162
        %v1164 = vand.u32 %v1163, 4294901760
        %v1165 = vsub.f32 %v1163, %v1164
        %v1166 = vand.u32 %v1165, 4294901760
        %1167 = vmatmul.mubr.f32.gmra.mxu0 %v1166
        %v1168 = vpop.f32.mrf.mxu0
        %v1169 = vadd.f32 0.0, %v1168
        %v1170 = vpop.f32.mrf.mxu0
        %v1171 = vadd.f32 0.0, %v1170
        %1172 = vmatprep.mubr.f32.mxu0 0.0
        %v1173 = vand.u32 %v777, 4294901760
        %v1174 = vsub.f32 %v777, %v1173
        %v1175 = vand.u32 %v1174, 4294901760
        %v1176 = vsub.f32 %v1174, %v1175
        %v1177 = vand.u32 %v1176, 4294901760
        %1178 = vmatmul.mubr.f32.gmra.mxu0 %v1177
        %v1179 = vpop.f32.mrf.mxu0
        %v1180 = vadd.f32 0.0, %v1179
        %v1181 = vpop.f32.mrf.mxu0
        %v1182 = vadd.f32 0.0, %v1181
        %1183 = vmatprep.mubr.f32.mxu0 0.0
        %v1184 = vand.u32 %v780, 4294901760
        %v1185 = vsub.f32 %v780, %v1184
        %v1186 = vand.u32 %v1185, 4294901760
        %v1187 = vsub.f32 %v1185, %v1186
        %v1188 = vand.u32 %v1187, 4294901760
        %1189 = vmatmul.mubr.f32.gmra.mxu0 %v1188
        %v1190 = vpop.f32.mrf.mxu0
        %v1191 = vadd.f32 0.0, %v1190
        %v1192 = vpop.f32.mrf.mxu0
        %v1193 = vadd.f32 0.0, %v1192
        %1194 = vmatprep.mubr.f32.mxu0 0.0
        %v1195 = vand.u32 %v783, 4294901760
        %v1196 = vsub.f32 %v783, %v1195
        %v1197 = vand.u32 %v1196, 4294901760
        %v1198 = vsub.f32 %v1196, %v1197
        %v1199 = vand.u32 %v1198, 4294901760
        %1200 = vmatmul.mubr.f32.gmra.mxu0 %v1199
        %v1201 = vpop.f32.mrf.mxu0
        %v1202 = vadd.f32 0.0, %v1201
        %v1203 = vpop.f32.mrf.mxu0
        %v1204 = vadd.f32 0.0, %v1203
        %1205 = vmatprep.mubr.f32.mxu0 0.0
        %v1206 = vand.u32 %v786, 4294901760
        %v1207 = vsub.f32 %v786, %v1206
        %v1208 = vand.u32 %v1207, 4294901760
        %v1209 = vsub.f32 %v1207, %v1208
        %v1210 = vand.u32 %v1209, 4294901760
        %1211 = vmatmul.mubr.f32.gmra.mxu0 %v1210
        %v1212 = vpop.f32.mrf.mxu0
        %v1213 = vadd.f32 0.0, %v1212
        %v1214 = vpop.f32.mrf.mxu0
        %v1215 = vadd.f32 0.0, %v1214
        %1216 = vdwg.mxu0
        %1217 = vmatprep.subr.mxu0 0.0
        %1218 = vmatpush1.msra.mxu0 0.0
        %1219 = vmatprep.subr.mxu0 0.0
        %1220 = vmatpush1.msra.mxu0 0.0
        %1221 = vmatprep.subr.mxu0 0.0
        %1222 = vmatpush1.msra.mxu0 0.0
        %1223 = vmatprep.subr.mxu0 0.0
        %1224 = vmatpush1.msra.mxu0 0.0
        %1225 = vmatprep.subr.mxu0 0.0
        %1226 = vmatpush1.msra.mxu0 0.0
        %1227 = vmatprep.subr.mxu0 0.0
        %1228 = vmatpush1.msra.mxu0 0.0
        %1229 = vmatprep.subr.mxu0 0.0
        %1230 = vmatpush1.msra.mxu0 0.0
        %1231 = vmatprep.subr.mxu0 0.0
        %1232 = vmatpush1.msra.mxu0 0.0
        %1233 = vmatprep.subr.mxu0 0.0
        %1234 = vmatpush1.msra.mxu0 0.0
        %1235 = vmatprep.subr.mxu0 0.0
        %1236 = vmatpush1.msra.mxu0 0.0
        %v1237 = vand.u32 %v690, 4294901760
        %v1238 = vsub.f32 %v690, %v1237
        %v1239 = vand.u32 %v1238, 4294901760
        %v1240 = vsub.f32 %v1238, %v1239
        %v1241 = vand.u32 %v1240, 4294901760
        %1242 = vmatprep.subr.mxu0 %v1241
        %v1243 = vand.u32 %v689, 4294901760
        %v1244 = vsub.f32 %v689, %v1243
        %v1245 = vand.u32 %v1244, 4294901760
        %v1246 = vsub.f32 %v1244, %v1245
        %v1247 = vand.u32 %v1246, 4294901760
        %1248 = vmatpush1.msra.mxu0 %v1247
        %v1249 = vand.u32 %v688, 4294901760
        %v1250 = vsub.f32 %v688, %v1249
        %v1251 = vand.u32 %v1250, 4294901760
        %v1252 = vsub.f32 %v1250, %v1251
        %v1253 = vand.u32 %v1252, 4294901760
        %1254 = vmatprep.subr.mxu0 %v1253
        %v1255 = vand.u32 %v687, 4294901760
        %v1256 = vsub.f32 %v687, %v1255
        %v1257 = vand.u32 %v1256, 4294901760
        %v1258 = vsub.f32 %v1256, %v1257
        %v1259 = vand.u32 %v1258, 4294901760
        %1260 = vmatpush1.msra.mxu0 %v1259
        %v1261 = vand.u32 %v686, 4294901760
        %v1262 = vsub.f32 %v686, %v1261
        %v1263 = vand.u32 %v1262, 4294901760
        %v1264 = vsub.f32 %v1262, %v1263
        %v1265 = vand.u32 %v1264, 4294901760
        %1266 = vmatprep.subr.mxu0 %v1265
        %v1267 = vand.u32 %v685, 4294901760
        %v1268 = vsub.f32 %v685, %v1267
        %v1269 = vand.u32 %v1268, 4294901760
        %v1270 = vsub.f32 %v1268, %v1269
        %v1271 = vand.u32 %v1270, 4294901760
        %1272 = vmatpush1.msra.mxu0 %v1271
        %v1273 = vand.u32 %v684, 4294901760
        %v1274 = vsub.f32 %v684, %v1273
        %v1275 = vand.u32 %v1274, 4294901760
        %v1276 = vsub.f32 %v1274, %v1275
        %v1277 = vand.u32 %v1276, 4294901760
        %1278 = vmatprep.subr.mxu0 %v1277
        %v1279 = vand.u32 %v683, 4294901760
        %v1280 = vsub.f32 %v683, %v1279
        %v1281 = vand.u32 %v1280, 4294901760
        %v1282 = vsub.f32 %v1280, %v1281
        %v1283 = vand.u32 %v1282, 4294901760
        %1284 = vmatpush1.msra.mxu0 %v1283
        %v1285 = vand.u32 %v682, 4294901760
        %v1286 = vsub.f32 %v682, %v1285
        %v1287 = vand.u32 %v1286, 4294901760
        %v1288 = vsub.f32 %v1286, %v1287
        %v1289 = vand.u32 %v1288, 4294901760
        %1290 = vmatprep.subr.mxu0 %v1289
        %v1291 = vand.u32 %v681, 4294901760
        %v1292 = vsub.f32 %v681, %v1291
        %v1293 = vand.u32 %v1292, 4294901760
        %v1294 = vsub.f32 %v1292, %v1293
        %v1295 = vand.u32 %v1294, 4294901760
        %1296 = vmatpush1.msra.mxu0 %v1295
        %v1297 = vand.u32 %v680, 4294901760
        %v1298 = vsub.f32 %v680, %v1297
        %v1299 = vand.u32 %v1298, 4294901760
        %v1300 = vsub.f32 %v1298, %v1299
        %v1301 = vand.u32 %v1300, 4294901760
        %1302 = vmatprep.subr.mxu0 %v1301
        %v1303 = vand.u32 %v679, 4294901760
        %v1304 = vsub.f32 %v679, %v1303
        %v1305 = vand.u32 %v1304, 4294901760
        %v1306 = vsub.f32 %v1304, %v1305
        %v1307 = vand.u32 %v1306, 4294901760
        %1308 = vmatpush1.msra.mxu0 %v1307
        %1309 = vmatprep.subr.mxu0 0.0
        %1310 = vmatpush2.msra.mxu0 0.0
        %1311 = vmatprep.subr.mxu0 0.0
        %1312 = vmatpush2.msra.mxu0 0.0
        %1313 = vmatprep.subr.mxu0 0.0
        %1314 = vmatpush2.msra.mxu0 0.0
        %1315 = vmatprep.subr.mxu0 0.0
        %1316 = vmatpush2.msra.mxu0 0.0
        %1317 = vmatprep.subr.mxu0 0.0
        %1318 = vmatpush2.msra.mxu0 0.0
        %1319 = vmatprep.subr.mxu0 0.0
        %1320 = vmatpush2.msra.mxu0 0.0
        %1321 = vmatprep.subr.mxu0 0.0
        %1322 = vmatpush2.msra.mxu0 0.0
        %1323 = vmatprep.subr.mxu0 0.0
        %1324 = vmatpush2.msra.mxu0 0.0
        %1325 = vmatprep.subr.mxu0 0.0
        %1326 = vmatpush2.msra.mxu0 0.0
        %1327 = vmatprep.subr.mxu0 0.0
        %1328 = vmatpush2.msra.mxu0 0.0
        %1329 = vmatprep.subr.mxu0 0.0
        %1330 = vmatpush2.msra.mxu0 0.0
        %1331 = vmatprep.subr.mxu0 0.0
        %1332 = vmatpush2.msra.mxu0 0.0
        %1333 = vmatprep.subr.mxu0 0.0
        %1334 = vmatpush2.msra.mxu0 0.0
        %1335 = vmatprep.subr.mxu0 0.0
        %1336 = vmatpush2.msra.mxu0 0.0
        %1337 = vmatprep.subr.mxu0 0.0
        %1338 = vmatpush2.msra.mxu0 0.0
        %1339 = vmatprep.subr.mxu0 0.0
        %1340 = vmatpush2.msra.mxu0 0.0
        %1341 = vmatprep.mubr.f32.mxu0 0.0
        %v1342 = vand.u32 %v693, 4294901760
        %1343 = vmatmul.mubr.f32.gmra.mxu0 %v1342
        %v1344 = vpop.f32.mrf.mxu0
        %v1345 = vadd.f32 %v872, %v1344
        %v1346 = vpop.f32.mrf.mxu0
        %v1347 = vadd.f32 %v874, %v1346
        %1348 = vmatprep.mubr.f32.mxu0 0.0
        %v1349 = vand.u32 %v696, 4294901760
        %1350 = vmatmul.mubr.f32.gmra.mxu0 %v1349
        %v1351 = vpop.f32.mrf.mxu0
        %v1352 = vadd.f32 %v883, %v1351
        %v1353 = vpop.f32.mrf.mxu0
        %v1354 = vadd.f32 %v885, %v1353
        %1355 = vmatprep.mubr.f32.mxu0 0.0
        %v1356 = vand.u32 %v699, 4294901760
        %1357 = vmatmul.mubr.f32.gmra.mxu0 %v1356
        %v1358 = vpop.f32.mrf.mxu0
        %v1359 = vadd.f32 %v894, %v1358
        %v1360 = vpop.f32.mrf.mxu0
        %v1361 = vadd.f32 %v896, %v1360
        %1362 = vmatprep.mubr.f32.mxu0 0.0
        %v1363 = vand.u32 %v702, 4294901760
        %1364 = vmatmul.mubr.f32.gmra.mxu0 %v1363
        %v1365 = vpop.f32.mrf.mxu0
        %v1366 = vadd.f32 %v905, %v1365
        %v1367 = vpop.f32.mrf.mxu0
        %v1368 = vadd.f32 %v907, %v1367
        %1369 = vmatprep.mubr.f32.mxu0 0.0
        %v1370 = vand.u32 %v705, 4294901760
        %1371 = vmatmul.mubr.f32.gmra.mxu0 %v1370
        %v1372 = vpop.f32.mrf.mxu0
        %v1373 = vadd.f32 %v916, %v1372
        %v1374 = vpop.f32.mrf.mxu0
        %v1375 = vadd.f32 %v918, %v1374
        %1376 = vmatprep.mubr.f32.mxu0 0.0
        %v1377 = vand.u32 %v708, 4294901760
        %1378 = vmatmul.mubr.f32.gmra.mxu0 %v1377
        %v1379 = vpop.f32.mrf.mxu0
        %v1380 = vadd.f32 %v927, %v1379
        %v1381 = vpop.f32.mrf.mxu0
        %v1382 = vadd.f32 %v929, %v1381
        %1383 = vmatprep.mubr.f32.mxu0 0.0
        %v1384 = vand.u32 %v711, 4294901760
        %1385 = vmatmul.mubr.f32.gmra.mxu0 %v1384
        %v1386 = vpop.f32.mrf.mxu0
        %v1387 = vadd.f32 %v938, %v1386
        %v1388 = vpop.f32.mrf.mxu0
        %v1389 = vadd.f32 %v940, %v1388
        %1390 = vmatprep.mubr.f32.mxu0 0.0
        %v1391 = vand.u32 %v714, 4294901760
        %1392 = vmatmul.mubr.f32.gmra.mxu0 %v1391
        %v1393 = vpop.f32.mrf.mxu0
        %v1394 = vadd.f32 %v949, %v1393
        %v1395 = vpop.f32.mrf.mxu0
        %v1396 = vadd.f32 %v951, %v1395
        %1397 = vmatprep.mubr.f32.mxu0 0.0
        %v1398 = vand.u32 %v717, 4294901760
        %1399 = vmatmul.mubr.f32.gmra.mxu0 %v1398
        %v1400 = vpop.f32.mrf.mxu0
        %v1401 = vadd.f32 %v960, %v1400
        %v1402 = vpop.f32.mrf.mxu0
        %v1403 = vadd.f32 %v962, %v1402
        %1404 = vmatprep.mubr.f32.mxu0 0.0
        %v1405 = vand.u32 %v720, 4294901760
        %1406 = vmatmul.mubr.f32.gmra.mxu0 %v1405
        %v1407 = vpop.f32.mrf.mxu0
        %v1408 = vadd.f32 %v971, %v1407
        %v1409 = vpop.f32.mrf.mxu0
        %v1410 = vadd.f32 %v973, %v1409
        %1411 = vmatprep.mubr.f32.mxu0 0.0
        %v1412 = vand.u32 %v723, 4294901760
        %1413 = vmatmul.mubr.f32.gmra.mxu0 %v1412
        %v1414 = vpop.f32.mrf.mxu0
        %v1415 = vadd.f32 %v982, %v1414
        %v1416 = vpop.f32.mrf.mxu0
        %v1417 = vadd.f32 %v984, %v1416
        %1418 = vmatprep.mubr.f32.mxu0 0.0
        %v1419 = vand.u32 %v726, 4294901760
        %1420 = vmatmul.mubr.f32.gmra.mxu0 %v1419
        %v1421 = vpop.f32.mrf.mxu0
        %v1422 = vadd.f32 %v993, %v1421
        %v1423 = vpop.f32.mrf.mxu0
        %v1424 = vadd.f32 %v995, %v1423
        %1425 = vmatprep.mubr.f32.mxu0 0.0
        %v1426 = vand.u32 %v729, 4294901760
        %1427 = vmatmul.mubr.f32.gmra.mxu0 %v1426
        %v1428 = vpop.f32.mrf.mxu0
        %v1429 = vadd.f32 %v1004, %v1428
        %v1430 = vpop.f32.mrf.mxu0
        %v1431 = vadd.f32 %v1006, %v1430
        %1432 = vmatprep.mubr.f32.mxu0 0.0
        %v1433 = vand.u32 %v732, 4294901760
        %1434 = vmatmul.mubr.f32.gmra.mxu0 %v1433
        %v1435 = vpop.f32.mrf.mxu0
        %v1436 = vadd.f32 %v1015, %v1435
        %v1437 = vpop.f32.mrf.mxu0
        %v1438 = vadd.f32 %v1017, %v1437
        %1439 = vmatprep.mubr.f32.mxu0 0.0
        %v1440 = vand.u32 %v735, 4294901760
        %1441 = vmatmul.mubr.f32.gmra.mxu0 %v1440
        %v1442 = vpop.f32.mrf.mxu0
        %v1443 = vadd.f32 %v1026, %v1442
        %v1444 = vpop.f32.mrf.mxu0
        %v1445 = vadd.f32 %v1028, %v1444
        %1446 = vmatprep.mubr.f32.mxu0 0.0
        %v1447 = vand.u32 %v738, 4294901760
        %1448 = vmatmul.mubr.f32.gmra.mxu0 %v1447
        %v1449 = vpop.f32.mrf.mxu0
        %v1450 = vadd.f32 %v1037, %v1449
        %v1451 = vpop.f32.mrf.mxu0
        %v1452 = vadd.f32 %v1039, %v1451
        %1453 = vmatprep.mubr.f32.mxu0 0.0
        %v1454 = vand.u32 %v741, 4294901760
        %1455 = vmatmul.mubr.f32.gmra.mxu0 %v1454
        %v1456 = vpop.f32.mrf.mxu0
        %v1457 = vadd.f32 %v1048, %v1456
        %v1458 = vpop.f32.mrf.mxu0
        %v1459 = vadd.f32 %v1050, %v1458
        %1460 = vmatprep.mubr.f32.mxu0 0.0
        %v1461 = vand.u32 %v744, 4294901760
        %1462 = vmatmul.mubr.f32.gmra.mxu0 %v1461
        %v1463 = vpop.f32.mrf.mxu0
        %v1464 = vadd.f32 %v1059, %v1463
        %v1465 = vpop.f32.mrf.mxu0
        %v1466 = vadd.f32 %v1061, %v1465
        %1467 = vmatprep.mubr.f32.mxu0 0.0
        %v1468 = vand.u32 %v747, 4294901760
        %1469 = vmatmul.mubr.f32.gmra.mxu0 %v1468
        %v1470 = vpop.f32.mrf.mxu0
        %v1471 = vadd.f32 %v1070, %v1470
        %v1472 = vpop.f32.mrf.mxu0
        %v1473 = vadd.f32 %v1072, %v1472
        %1474 = vmatprep.mubr.f32.mxu0 0.0
        %v1475 = vand.u32 %v750, 4294901760
        %1476 = vmatmul.mubr.f32.gmra.mxu0 %v1475
        %v1477 = vpop.f32.mrf.mxu0
        %v1478 = vadd.f32 %v1081, %v1477
        %v1479 = vpop.f32.mrf.mxu0
        %v1480 = vadd.f32 %v1083, %v1479
        %1481 = vmatprep.mubr.f32.mxu0 0.0
        %v1482 = vand.u32 %v753, 4294901760
        %1483 = vmatmul.mubr.f32.gmra.mxu0 %v1482
        %v1484 = vpop.f32.mrf.mxu0
        %v1485 = vadd.f32 %v1092, %v1484
        %v1486 = vpop.f32.mrf.mxu0
        %v1487 = vadd.f32 %v1094, %v1486
        %1488 = vmatprep.mubr.f32.mxu0 0.0
        %v1489 = vand.u32 %v756, 4294901760
        %1490 = vmatmul.mubr.f32.gmra.mxu0 %v1489
        %v1491 = vpop.f32.mrf.mxu0
        %v1492 = vadd.f32 %v1103, %v1491
        %v1493 = vpop.f32.mrf.mxu0
        %v1494 = vadd.f32 %v1105, %v1493
        %1495 = vmatprep.mubr.f32.mxu0 0.0
        %v1496 = vand.u32 %v759, 4294901760
        %1497 = vmatmul.mubr.f32.gmra.mxu0 %v1496
        %v1498 = vpop.f32.mrf.mxu0
        %v1499 = vadd.f32 %v1114, %v1498
        %v1500 = vpop.f32.mrf.mxu0
        %v1501 = vadd.f32 %v1116, %v1500
        %1502 = vmatprep.mubr.f32.mxu0 0.0
        %v1503 = vand.u32 %v762, 4294901760
        %1504 = vmatmul.mubr.f32.gmra.mxu0 %v1503
        %v1505 = vpop.f32.mrf.mxu0
        %v1506 = vadd.f32 %v1125, %v1505
        %v1507 = vpop.f32.mrf.mxu0
        %v1508 = vadd.f32 %v1127, %v1507
        %1509 = vmatprep.mubr.f32.mxu0 0.0
        %v1510 = vand.u32 %v765, 4294901760
        %1511 = vmatmul.mubr.f32.gmra.mxu0 %v1510
        %v1512 = vpop.f32.mrf.mxu0
        %v1513 = vadd.f32 %v1136, %v1512
        %v1514 = vpop.f32.mrf.mxu0
        %v1515 = vadd.f32 %v1138, %v1514
        %1516 = vmatprep.mubr.f32.mxu0 0.0
        %v1517 = vand.u32 %v768, 4294901760
        %1518 = vmatmul.mubr.f32.gmra.mxu0 %v1517
        %v1519 = vpop.f32.mrf.mxu0
        %v1520 = vadd.f32 %v1147, %v1519
        %v1521 = vpop.f32.mrf.mxu0
        %v1522 = vadd.f32 %v1149, %v1521
        %1523 = vmatprep.mubr.f32.mxu0 0.0
        %v1524 = vand.u32 %v771, 4294901760
        %1525 = vmatmul.mubr.f32.gmra.mxu0 %v1524
        %v1526 = vpop.f32.mrf.mxu0
        %v1527 = vadd.f32 %v1158, %v1526
        %v1528 = vpop.f32.mrf.mxu0
        %v1529 = vadd.f32 %v1160, %v1528
        %1530 = vmatprep.mubr.f32.mxu0 0.0
        %v1531 = vand.u32 %v774, 4294901760
        %1532 = vmatmul.mubr.f32.gmra.mxu0 %v1531
        %v1533 = vpop.f32.mrf.mxu0
        %v1534 = vadd.f32 %v1169, %v1533
        %v1535 = vpop.f32.mrf.mxu0
        %v1536 = vadd.f32 %v1171, %v1535
        %1537 = vmatprep.mubr.f32.mxu0 0.0
        %v1538 = vand.u32 %v777, 4294901760
        %1539 = vmatmul.mubr.f32.gmra.mxu0 %v1538
        %v1540 = vpop.f32.mrf.mxu0
        %v1541 = vadd.f32 %v1180, %v1540
        %v1542 = vpop.f32.mrf.mxu0
        %v1543 = vadd.f32 %v1182, %v1542
        %1544 = vmatprep.mubr.f32.mxu0 0.0
        %v1545 = vand.u32 %v780, 4294901760
        %1546 = vmatmul.mubr.f32.gmra.mxu0 %v1545
        %v1547 = vpop.f32.mrf.mxu0
        %v1548 = vadd.f32 %v1191, %v1547
        %v1549 = vpop.f32.mrf.mxu0
        %v1550 = vadd.f32 %v1193, %v1549
        %1551 = vmatprep.mubr.f32.mxu0 0.0
        %v1552 = vand.u32 %v783, 4294901760
        %1553 = vmatmul.mubr.f32.gmra.mxu0 %v1552
        %v1554 = vpop.f32.mrf.mxu0
        %v1555 = vadd.f32 %v1202, %v1554
        %v1556 = vpop.f32.mrf.mxu0
        %v1557 = vadd.f32 %v1204, %v1556
        %1558 = vmatprep.mubr.f32.mxu0 0.0
        %v1559 = vand.u32 %v786, 4294901760
        %1560 = vmatmul.mubr.f32.gmra.mxu0 %v1559
        %v1561 = vpop.f32.mrf.mxu0
        %v1562 = vadd.f32 %v1213, %v1561
        %v1563 = vpop.f32.mrf.mxu0
        %v1564 = vadd.f32 %v1215, %v1563
        %1565 = vdwg.mxu0
        %1566 = vmatprep.subr.mxu0 0.0
        %1567 = vmatpush1.msra.mxu0 0.0
        %1568 = vmatprep.subr.mxu0 0.0
        %1569 = vmatpush1.msra.mxu0 0.0
        %1570 = vmatprep.subr.mxu0 0.0
        %1571 = vmatpush1.msra.mxu0 0.0
        %1572 = vmatprep.subr.mxu0 0.0
        %1573 = vmatpush1.msra.mxu0 0.0
        %1574 = vmatprep.subr.mxu0 0.0
        %1575 = vmatpush1.msra.mxu0 0.0
        %1576 = vmatprep.subr.mxu0 0.0
        %1577 = vmatpush1.msra.mxu0 0.0
        %1578 = vmatprep.subr.mxu0 0.0
        %1579 = vmatpush1.msra.mxu0 0.0
        %1580 = vmatprep.subr.mxu0 0.0
        %1581 = vmatpush1.msra.mxu0 0.0
        %1582 = vmatprep.subr.mxu0 0.0
        %1583 = vmatpush1.msra.mxu0 0.0
        %1584 = vmatprep.subr.mxu0 0.0
        %1585 = vmatpush1.msra.mxu0 0.0
        %v1586 = vand.u32 %v690, 4294901760
        %v1587 = vsub.f32 %v690, %v1586
        %1588 = vmatprep.subr.mxu0 %v1587
        %v1589 = vand.u32 %v689, 4294901760
        %v1590 = vsub.f32 %v689, %v1589
        %1591 = vmatpush1.msra.mxu0 %v1590
        %v1592 = vand.u32 %v688, 4294901760
        %v1593 = vsub.f32 %v688, %v1592
        %1594 = vmatprep.subr.mxu0 %v1593
        %v1595 = vand.u32 %v687, 4294901760
        %v1596 = vsub.f32 %v687, %v1595
        %1597 = vmatpush1.msra.mxu0 %v1596
        %v1598 = vand.u32 %v686, 4294901760
        %v1599 = vsub.f32 %v686, %v1598
        %1600 = vmatprep.subr.mxu0 %v1599
        %v1601 = vand.u32 %v685, 4294901760
        %v1602 = vsub.f32 %v685, %v1601
        %1603 = vmatpush1.msra.mxu0 %v1602
        %v1604 = vand.u32 %v684, 4294901760
        %v1605 = vsub.f32 %v684, %v1604
        %1606 = vmatprep.subr.mxu0 %v1605
        %v1607 = vand.u32 %v683, 4294901760
        %v1608 = vsub.f32 %v683, %v1607
        %1609 = vmatpush1.msra.mxu0 %v1608
        %v1610 = vand.u32 %v682, 4294901760
        %v1611 = vsub.f32 %v682, %v1610
        %1612 = vmatprep.subr.mxu0 %v1611
        %v1613 = vand.u32 %v681, 4294901760
        %v1614 = vsub.f32 %v681, %v1613
        %1615 = vmatpush1.msra.mxu0 %v1614
        %v1616 = vand.u32 %v680, 4294901760
        %v1617 = vsub.f32 %v680, %v1616
        %1618 = vmatprep.subr.mxu0 %v1617
        %v1619 = vand.u32 %v679, 4294901760
        %v1620 = vsub.f32 %v679, %v1619
        %1621 = vmatpush1.msra.mxu0 %v1620
        %1622 = vmatprep.subr.mxu0 0.0
        %1623 = vmatpush2.msra.mxu0 0.0
        %1624 = vmatprep.subr.mxu0 0.0
        %1625 = vmatpush2.msra.mxu0 0.0
        %1626 = vmatprep.subr.mxu0 0.0
        %1627 = vmatpush2.msra.mxu0 0.0
        %1628 = vmatprep.subr.mxu0 0.0
        %1629 = vmatpush2.msra.mxu0 0.0
        %1630 = vmatprep.subr.mxu0 0.0
        %1631 = vmatpush2.msra.mxu0 0.0
        %1632 = vmatprep.subr.mxu0 0.0
        %1633 = vmatpush2.msra.mxu0 0.0
        %1634 = vmatprep.subr.mxu0 0.0
        %1635 = vmatpush2.msra.mxu0 0.0
        %1636 = vmatprep.subr.mxu0 0.0
        %1637 = vmatpush2.msra.mxu0 0.0
        %1638 = vmatprep.subr.mxu0 0.0
        %1639 = vmatpush2.msra.mxu0 0.0
        %1640 = vmatprep.subr.mxu0 0.0
        %1641 = vmatpush2.msra.mxu0 0.0
        %1642 = vmatprep.subr.mxu0 0.0
        %1643 = vmatpush2.msra.mxu0 0.0
        %1644 = vmatprep.subr.mxu0 0.0
        %1645 = vmatpush2.msra.mxu0 0.0
        %1646 = vmatprep.subr.mxu0 0.0
        %1647 = vmatpush2.msra.mxu0 0.0
        %1648 = vmatprep.subr.mxu0 0.0
        %1649 = vmatpush2.msra.mxu0 0.0
        %1650 = vmatprep.subr.mxu0 0.0
        %1651 = vmatpush2.msra.mxu0 0.0
        %1652 = vmatprep.subr.mxu0 0.0
        %1653 = vmatpush2.msra.mxu0 0.0
        %1654 = vmatprep.mubr.f32.mxu0 0.0
        %v1655 = vand.u32 %v693, 4294901760
        %v1656 = vsub.f32 %v693, %v1655
        %1657 = vmatmul.mubr.f32.gmra.mxu0 %v1656
        %v1658 = vpop.f32.mrf.mxu0
        %v1659 = vadd.f32 %v1345, %v1658
        %v1660 = vpop.f32.mrf.mxu0
        %v1661 = vadd.f32 %v1347, %v1660
        %1662 = vmatprep.mubr.f32.mxu0 0.0
        %v1663 = vand.u32 %v696, 4294901760
        %v1664 = vsub.f32 %v696, %v1663
        %1665 = vmatmul.mubr.f32.gmra.mxu0 %v1664
        %v1666 = vpop.f32.mrf.mxu0
        %v1667 = vadd.f32 %v1352, %v1666
        %v1668 = vpop.f32.mrf.mxu0
        %v1669 = vadd.f32 %v1354, %v1668
        %1670 = vmatprep.mubr.f32.mxu0 0.0
        %v1671 = vand.u32 %v699, 4294901760
        %v1672 = vsub.f32 %v699, %v1671
        %1673 = vmatmul.mubr.f32.gmra.mxu0 %v1672
        %v1674 = vpop.f32.mrf.mxu0
        %v1675 = vadd.f32 %v1359, %v1674
        %v1676 = vpop.f32.mrf.mxu0
        %v1677 = vadd.f32 %v1361, %v1676
        %1678 = vmatprep.mubr.f32.mxu0 0.0
        %v1679 = vand.u32 %v702, 4294901760
        %v1680 = vsub.f32 %v702, %v1679
        %1681 = vmatmul.mubr.f32.gmra.mxu0 %v1680
        %v1682 = vpop.f32.mrf.mxu0
        %v1683 = vadd.f32 %v1366, %v1682
        %v1684 = vpop.f32.mrf.mxu0
        %v1685 = vadd.f32 %v1368, %v1684
        %1686 = vmatprep.mubr.f32.mxu0 0.0
        %v1687 = vand.u32 %v705, 4294901760
        %v1688 = vsub.f32 %v705, %v1687
        %1689 = vmatmul.mubr.f32.gmra.mxu0 %v1688
        %v1690 = vpop.f32.mrf.mxu0
        %v1691 = vadd.f32 %v1373, %v1690
        %v1692 = vpop.f32.mrf.mxu0
        %v1693 = vadd.f32 %v1375, %v1692
        %1694 = vmatprep.mubr.f32.mxu0 0.0
        %v1695 = vand.u32 %v708, 4294901760
        %v1696 = vsub.f32 %v708, %v1695
        %1697 = vmatmul.mubr.f32.gmra.mxu0 %v1696
        %v1698 = vpop.f32.mrf.mxu0
        %v1699 = vadd.f32 %v1380, %v1698
        %v1700 = vpop.f32.mrf.mxu0
        %v1701 = vadd.f32 %v1382, %v1700
        %1702 = vmatprep.mubr.f32.mxu0 0.0
        %v1703 = vand.u32 %v711, 4294901760
        %v1704 = vsub.f32 %v711, %v1703
        %1705 = vmatmul.mubr.f32.gmra.mxu0 %v1704
        %v1706 = vpop.f32.mrf.mxu0
        %v1707 = vadd.f32 %v1387, %v1706
        %v1708 = vpop.f32.mrf.mxu0
        %v1709 = vadd.f32 %v1389, %v1708
        %1710 = vmatprep.mubr.f32.mxu0 0.0
        %v1711 = vand.u32 %v714, 4294901760
        %v1712 = vsub.f32 %v714, %v1711
        %1713 = vmatmul.mubr.f32.gmra.mxu0 %v1712
        %v1714 = vpop.f32.mrf.mxu0
        %v1715 = vadd.f32 %v1394, %v1714
        %v1716 = vpop.f32.mrf.mxu0
        %v1717 = vadd.f32 %v1396, %v1716
        %1718 = vmatprep.mubr.f32.mxu0 0.0
        %v1719 = vand.u32 %v717, 4294901760
        %v1720 = vsub.f32 %v717, %v1719
        %1721 = vmatmul.mubr.f32.gmra.mxu0 %v1720
        %v1722 = vpop.f32.mrf.mxu0
        %v1723 = vadd.f32 %v1401, %v1722
        %v1724 = vpop.f32.mrf.mxu0
        %v1725 = vadd.f32 %v1403, %v1724
        %1726 = vmatprep.mubr.f32.mxu0 0.0
        %v1727 = vand.u32 %v720, 4294901760
        %v1728 = vsub.f32 %v720, %v1727
        %1729 = vmatmul.mubr.f32.gmra.mxu0 %v1728
        %v1730 = vpop.f32.mrf.mxu0
        %v1731 = vadd.f32 %v1408, %v1730
        %v1732 = vpop.f32.mrf.mxu0
        %v1733 = vadd.f32 %v1410, %v1732
        %1734 = vmatprep.mubr.f32.mxu0 0.0
        %v1735 = vand.u32 %v723, 4294901760
        %v1736 = vsub.f32 %v723, %v1735
        %1737 = vmatmul.mubr.f32.gmra.mxu0 %v1736
        %v1738 = vpop.f32.mrf.mxu0
        %v1739 = vadd.f32 %v1415, %v1738
        %v1740 = vpop.f32.mrf.mxu0
        %v1741 = vadd.f32 %v1417, %v1740
        %1742 = vmatprep.mubr.f32.mxu0 0.0
        %v1743 = vand.u32 %v726, 4294901760
        %v1744 = vsub.f32 %v726, %v1743
        %1745 = vmatmul.mubr.f32.gmra.mxu0 %v1744
        %v1746 = vpop.f32.mrf.mxu0
        %v1747 = vadd.f32 %v1422, %v1746
        %v1748 = vpop.f32.mrf.mxu0
        %v1749 = vadd.f32 %v1424, %v1748
        %1750 = vmatprep.mubr.f32.mxu0 0.0
        %v1751 = vand.u32 %v729, 4294901760
        %v1752 = vsub.f32 %v729, %v1751
        %1753 = vmatmul.mubr.f32.gmra.mxu0 %v1752
        %v1754 = vpop.f32.mrf.mxu0
        %v1755 = vadd.f32 %v1429, %v1754
        %v1756 = vpop.f32.mrf.mxu0
        %v1757 = vadd.f32 %v1431, %v1756
        %1758 = vmatprep.mubr.f32.mxu0 0.0
        %v1759 = vand.u32 %v732, 4294901760
        %v1760 = vsub.f32 %v732, %v1759
        %1761 = vmatmul.mubr.f32.gmra.mxu0 %v1760
        %v1762 = vpop.f32.mrf.mxu0
        %v1763 = vadd.f32 %v1436, %v1762
        %v1764 = vpop.f32.mrf.mxu0
        %v1765 = vadd.f32 %v1438, %v1764
        %1766 = vmatprep.mubr.f32.mxu0 0.0
        %v1767 = vand.u32 %v735, 4294901760
        %v1768 = vsub.f32 %v735, %v1767
        %1769 = vmatmul.mubr.f32.gmra.mxu0 %v1768
        %v1770 = vpop.f32.mrf.mxu0
        %v1771 = vadd.f32 %v1443, %v1770
        %v1772 = vpop.f32.mrf.mxu0
        %v1773 = vadd.f32 %v1445, %v1772
        %1774 = vmatprep.mubr.f32.mxu0 0.0
        %v1775 = vand.u32 %v738, 4294901760
        %v1776 = vsub.f32 %v738, %v1775
        %1777 = vmatmul.mubr.f32.gmra.mxu0 %v1776
        %v1778 = vpop.f32.mrf.mxu0
        %v1779 = vadd.f32 %v1450, %v1778
        %v1780 = vpop.f32.mrf.mxu0
        %v1781 = vadd.f32 %v1452, %v1780
        %1782 = vmatprep.mubr.f32.mxu0 0.0
        %v1783 = vand.u32 %v741, 4294901760
        %v1784 = vsub.f32 %v741, %v1783
        %1785 = vmatmul.mubr.f32.gmra.mxu0 %v1784
        %v1786 = vpop.f32.mrf.mxu0
        %v1787 = vadd.f32 %v1457, %v1786
        %v1788 = vpop.f32.mrf.mxu0
        %v1789 = vadd.f32 %v1459, %v1788
        %1790 = vmatprep.mubr.f32.mxu0 0.0
        %v1791 = vand.u32 %v744, 4294901760
        %v1792 = vsub.f32 %v744, %v1791
        %1793 = vmatmul.mubr.f32.gmra.mxu0 %v1792
        %v1794 = vpop.f32.mrf.mxu0
        %v1795 = vadd.f32 %v1464, %v1794
        %v1796 = vpop.f32.mrf.mxu0
        %v1797 = vadd.f32 %v1466, %v1796
        %1798 = vmatprep.mubr.f32.mxu0 0.0
        %v1799 = vand.u32 %v747, 4294901760
        %v1800 = vsub.f32 %v747, %v1799
        %1801 = vmatmul.mubr.f32.gmra.mxu0 %v1800
        %v1802 = vpop.f32.mrf.mxu0
        %v1803 = vadd.f32 %v1471, %v1802
        %v1804 = vpop.f32.mrf.mxu0
        %v1805 = vadd.f32 %v1473, %v1804
        %1806 = vmatprep.mubr.f32.mxu0 0.0
        %v1807 = vand.u32 %v750, 4294901760
        %v1808 = vsub.f32 %v750, %v1807
        %1809 = vmatmul.mubr.f32.gmra.mxu0 %v1808
        %v1810 = vpop.f32.mrf.mxu0
        %v1811 = vadd.f32 %v1478, %v1810
        %v1812 = vpop.f32.mrf.mxu0
        %v1813 = vadd.f32 %v1480, %v1812
        %1814 = vmatprep.mubr.f32.mxu0 0.0
        %v1815 = vand.u32 %v753, 4294901760
        %v1816 = vsub.f32 %v753, %v1815
        %1817 = vmatmul.mubr.f32.gmra.mxu0 %v1816
        %v1818 = vpop.f32.mrf.mxu0
        %v1819 = vadd.f32 %v1485, %v1818
        %v1820 = vpop.f32.mrf.mxu0
        %v1821 = vadd.f32 %v1487, %v1820
        %1822 = vmatprep.mubr.f32.mxu0 0.0
        %v1823 = vand.u32 %v756, 4294901760
        %v1824 = vsub.f32 %v756, %v1823
        %1825 = vmatmul.mubr.f32.gmra.mxu0 %v1824
        %v1826 = vpop.f32.mrf.mxu0
        %v1827 = vadd.f32 %v1492, %v1826
        %v1828 = vpop.f32.mrf.mxu0
        %v1829 = vadd.f32 %v1494, %v1828
        %1830 = vmatprep.mubr.f32.mxu0 0.0
        %v1831 = vand.u32 %v759, 4294901760
        %v1832 = vsub.f32 %v759, %v1831
        %1833 = vmatmul.mubr.f32.gmra.mxu0 %v1832
        %v1834 = vpop.f32.mrf.mxu0
        %v1835 = vadd.f32 %v1499, %v1834
        %v1836 = vpop.f32.mrf.mxu0
        %v1837 = vadd.f32 %v1501, %v1836
        %1838 = vmatprep.mubr.f32.mxu0 0.0
        %v1839 = vand.u32 %v762, 4294901760
        %v1840 = vsub.f32 %v762, %v1839
        %1841 = vmatmul.mubr.f32.gmra.mxu0 %v1840
        %v1842 = vpop.f32.mrf.mxu0
        %v1843 = vadd.f32 %v1506, %v1842
        %v1844 = vpop.f32.mrf.mxu0
        %v1845 = vadd.f32 %v1508, %v1844
        %1846 = vmatprep.mubr.f32.mxu0 0.0
        %v1847 = vand.u32 %v765, 4294901760
        %v1848 = vsub.f32 %v765, %v1847
        %1849 = vmatmul.mubr.f32.gmra.mxu0 %v1848
        %v1850 = vpop.f32.mrf.mxu0
        %v1851 = vadd.f32 %v1513, %v1850
        %v1852 = vpop.f32.mrf.mxu0
        %v1853 = vadd.f32 %v1515, %v1852
        %1854 = vmatprep.mubr.f32.mxu0 0.0
        %v1855 = vand.u32 %v768, 4294901760
        %v1856 = vsub.f32 %v768, %v1855
        %1857 = vmatmul.mubr.f32.gmra.mxu0 %v1856
        %v1858 = vpop.f32.mrf.mxu0
        %v1859 = vadd.f32 %v1520, %v1858
        %v1860 = vpop.f32.mrf.mxu0
        %v1861 = vadd.f32 %v1522, %v1860
        %1862 = vmatprep.mubr.f32.mxu0 0.0
        %v1863 = vand.u32 %v771, 4294901760
        %v1864 = vsub.f32 %v771, %v1863
        %1865 = vmatmul.mubr.f32.gmra.mxu0 %v1864
        %v1866 = vpop.f32.mrf.mxu0
        %v1867 = vadd.f32 %v1527, %v1866
        %v1868 = vpop.f32.mrf.mxu0
        %v1869 = vadd.f32 %v1529, %v1868
        %1870 = vmatprep.mubr.f32.mxu0 0.0
        %v1871 = vand.u32 %v774, 4294901760
        %v1872 = vsub.f32 %v774, %v1871
        %1873 = vmatmul.mubr.f32.gmra.mxu0 %v1872
        %v1874 = vpop.f32.mrf.mxu0
        %v1875 = vadd.f32 %v1534, %v1874
        %v1876 = vpop.f32.mrf.mxu0
        %v1877 = vadd.f32 %v1536, %v1876
        %1878 = vmatprep.mubr.f32.mxu0 0.0
        %v1879 = vand.u32 %v777, 4294901760
        %v1880 = vsub.f32 %v777, %v1879
        %1881 = vmatmul.mubr.f32.gmra.mxu0 %v1880
        %v1882 = vpop.f32.mrf.mxu0
        %v1883 = vadd.f32 %v1541, %v1882
        %v1884 = vpop.f32.mrf.mxu0
        %v1885 = vadd.f32 %v1543, %v1884
        %1886 = vmatprep.mubr.f32.mxu0 0.0
        %v1887 = vand.u32 %v780, 4294901760
        %v1888 = vsub.f32 %v780, %v1887
        %1889 = vmatmul.mubr.f32.gmra.mxu0 %v1888
        %v1890 = vpop.f32.mrf.mxu0
        %v1891 = vadd.f32 %v1548, %v1890
        %v1892 = vpop.f32.mrf.mxu0
        %v1893 = vadd.f32 %v1550, %v1892
        %1894 = vmatprep.mubr.f32.mxu0 0.0
        %v1895 = vand.u32 %v783, 4294901760
        %v1896 = vsub.f32 %v783, %v1895
        %1897 = vmatmul.mubr.f32.gmra.mxu0 %v1896
        %v1898 = vpop.f32.mrf.mxu0
        %v1899 = vadd.f32 %v1555, %v1898
        %v1900 = vpop.f32.mrf.mxu0
        %v1901 = vadd.f32 %v1557, %v1900
        %1902 = vmatprep.mubr.f32.mxu0 0.0
        %v1903 = vand.u32 %v786, 4294901760
        %v1904 = vsub.f32 %v786, %v1903
        %1905 = vmatmul.mubr.f32.gmra.mxu0 %v1904
        %v1906 = vpop.f32.mrf.mxu0
        %v1907 = vadd.f32 %v1562, %v1906
        %v1908 = vpop.f32.mrf.mxu0
        %v1909 = vadd.f32 %v1564, %v1908
        %1910 = vdwg.mxu0
        %1911 = vmatprep.subr.mxu0 0.0
        %1912 = vmatpush1.msra.mxu0 0.0
        %1913 = vmatprep.subr.mxu0 0.0
        %1914 = vmatpush1.msra.mxu0 0.0
        %1915 = vmatprep.subr.mxu0 0.0
        %1916 = vmatpush1.msra.mxu0 0.0
        %1917 = vmatprep.subr.mxu0 0.0
        %1918 = vmatpush1.msra.mxu0 0.0
        %1919 = vmatprep.subr.mxu0 0.0
        %1920 = vmatpush1.msra.mxu0 0.0
        %1921 = vmatprep.subr.mxu0 0.0
        %1922 = vmatpush1.msra.mxu0 0.0
        %1923 = vmatprep.subr.mxu0 0.0
        %1924 = vmatpush1.msra.mxu0 0.0
        %1925 = vmatprep.subr.mxu0 0.0
        %1926 = vmatpush1.msra.mxu0 0.0
        %1927 = vmatprep.subr.mxu0 0.0
        %1928 = vmatpush1.msra.mxu0 0.0
        %1929 = vmatprep.subr.mxu0 0.0
        %1930 = vmatpush1.msra.mxu0 0.0
        %v1931 = vand.u32 %v690, 4294901760
        %1932 = vmatprep.subr.mxu0 %v1931
        %v1933 = vand.u32 %v689, 4294901760
        %1934 = vmatpush1.msra.mxu0 %v1933
        %v1935 = vand.u32 %v688, 4294901760
        %1936 = vmatprep.subr.mxu0 %v1935
        %v1937 = vand.u32 %v687, 4294901760
        %1938 = vmatpush1.msra.mxu0 %v1937
        %v1939 = vand.u32 %v686, 4294901760
        %1940 = vmatprep.subr.mxu0 %v1939
        %v1941 = vand.u32 %v685, 4294901760
        %1942 = vmatpush1.msra.mxu0 %v1941
        %v1943 = vand.u32 %v684, 4294901760
        %1944 = vmatprep.subr.mxu0 %v1943
        %v1945 = vand.u32 %v683, 4294901760
        %1946 = vmatpush1.msra.mxu0 %v1945
        %v1947 = vand.u32 %v682, 4294901760
        %1948 = vmatprep.subr.mxu0 %v1947
        %v1949 = vand.u32 %v681, 4294901760
        %1950 = vmatpush1.msra.mxu0 %v1949
        %v1951 = vand.u32 %v680, 4294901760
        %1952 = vmatprep.subr.mxu0 %v1951
        %v1953 = vand.u32 %v679, 4294901760
        %1954 = vmatpush1.msra.mxu0 %v1953
        %1955 = vmatprep.subr.mxu0 0.0
        %1956 = vmatpush2.msra.mxu0 0.0
        %1957 = vmatprep.subr.mxu0 0.0
        %1958 = vmatpush2.msra.mxu0 0.0
        %1959 = vmatprep.subr.mxu0 0.0
        %1960 = vmatpush2.msra.mxu0 0.0
        %1961 = vmatprep.subr.mxu0 0.0
        %1962 = vmatpush2.msra.mxu0 0.0
        %1963 = vmatprep.subr.mxu0 0.0
        %1964 = vmatpush2.msra.mxu0 0.0
        %1965 = vmatprep.subr.mxu0 0.0
        %1966 = vmatpush2.msra.mxu0 0.0
        %1967 = vmatprep.subr.mxu0 0.0
        %1968 = vmatpush2.msra.mxu0 0.0
        %1969 = vmatprep.subr.mxu0 0.0
        %1970 = vmatpush2.msra.mxu0 0.0
        %1971 = vmatprep.subr.mxu0 0.0
        %1972 = vmatpush2.msra.mxu0 0.0
        %1973 = vmatprep.subr.mxu0 0.0
        %1974 = vmatpush2.msra.mxu0 0.0
        %1975 = vmatprep.subr.mxu0 0.0
        %1976 = vmatpush2.msra.mxu0 0.0
        %1977 = vmatprep.subr.mxu0 0.0
        %1978 = vmatpush2.msra.mxu0 0.0
        %1979 = vmatprep.subr.mxu0 0.0
        %1980 = vmatpush2.msra.mxu0 0.0
        %1981 = vmatprep.subr.mxu0 0.0
        %1982 = vmatpush2.msra.mxu0 0.0
        %1983 = vmatprep.subr.mxu0 0.0
        %1984 = vmatpush2.msra.mxu0 0.0
        %1985 = vmatprep.subr.mxu0 0.0
        %1986 = vmatpush2.msra.mxu0 0.0
        %1987 = vmatprep.mubr.f32.mxu0 0.0
        %v1988 = vand.u32 %v693, 4294901760
        %v1989 = vsub.f32 %v693, %v1988
        %v1990 = vand.u32 %v1989, 4294901760
        %1991 = vmatmul.mubr.f32.gmra.mxu0 %v1990
        %v1992 = vpop.f32.mrf.mxu0
        %v1993 = vadd.f32 %v1659, %v1992
        %v1994 = vpop.f32.mrf.mxu0
        %v1995 = vadd.f32 %v1661, %v1994
        %1996 = vmatprep.mubr.f32.mxu0 0.0
        %v1997 = vand.u32 %v696, 4294901760
        %v1998 = vsub.f32 %v696, %v1997
        %v1999 = vand.u32 %v1998, 4294901760
        %2000 = vmatmul.mubr.f32.gmra.mxu0 %v1999
        %v2001 = vpop.f32.mrf.mxu0
        %v2002 = vadd.f32 %v1667, %v2001
        %v2003 = vpop.f32.mrf.mxu0
        %v2004 = vadd.f32 %v1669, %v2003
        %2005 = vmatprep.mubr.f32.mxu0 0.0
        %v2006 = vand.u32 %v699, 4294901760
        %v2007 = vsub.f32 %v699, %v2006
        %v2008 = vand.u32 %v2007, 4294901760
        %2009 = vmatmul.mubr.f32.gmra.mxu0 %v2008
        %v2010 = vpop.f32.mrf.mxu0
        %v2011 = vadd.f32 %v1675, %v2010
        %v2012 = vpop.f32.mrf.mxu0
        %v2013 = vadd.f32 %v1677, %v2012
        %2014 = vmatprep.mubr.f32.mxu0 0.0
        %v2015 = vand.u32 %v702, 4294901760
        %v2016 = vsub.f32 %v702, %v2015
        %v2017 = vand.u32 %v2016, 4294901760
        %2018 = vmatmul.mubr.f32.gmra.mxu0 %v2017
        %v2019 = vpop.f32.mrf.mxu0
        %v2020 = vadd.f32 %v1683, %v2019
        %v2021 = vpop.f32.mrf.mxu0
        %v2022 = vadd.f32 %v1685, %v2021
        %2023 = vmatprep.mubr.f32.mxu0 0.0
        %v2024 = vand.u32 %v705, 4294901760
        %v2025 = vsub.f32 %v705, %v2024
        %v2026 = vand.u32 %v2025, 4294901760
        %2027 = vmatmul.mubr.f32.gmra.mxu0 %v2026
        %v2028 = vpop.f32.mrf.mxu0
        %v2029 = vadd.f32 %v1691, %v2028
        %v2030 = vpop.f32.mrf.mxu0
        %v2031 = vadd.f32 %v1693, %v2030
        %2032 = vmatprep.mubr.f32.mxu0 0.0
        %v2033 = vand.u32 %v708, 4294901760
        %v2034 = vsub.f32 %v708, %v2033
        %v2035 = vand.u32 %v2034, 4294901760
        %2036 = vmatmul.mubr.f32.gmra.mxu0 %v2035
        %v2037 = vpop.f32.mrf.mxu0
        %v2038 = vadd.f32 %v1699, %v2037
        %v2039 = vpop.f32.mrf.mxu0
        %v2040 = vadd.f32 %v1701, %v2039
        %2041 = vmatprep.mubr.f32.mxu0 0.0
        %v2042 = vand.u32 %v711, 4294901760
        %v2043 = vsub.f32 %v711, %v2042
        %v2044 = vand.u32 %v2043, 4294901760
        %2045 = vmatmul.mubr.f32.gmra.mxu0 %v2044
        %v2046 = vpop.f32.mrf.mxu0
        %v2047 = vadd.f32 %v1707, %v2046
        %v2048 = vpop.f32.mrf.mxu0
        %v2049 = vadd.f32 %v1709, %v2048
        %2050 = vmatprep.mubr.f32.mxu0 0.0
        %v2051 = vand.u32 %v714, 4294901760
        %v2052 = vsub.f32 %v714, %v2051
        %v2053 = vand.u32 %v2052, 4294901760
        %2054 = vmatmul.mubr.f32.gmra.mxu0 %v2053
        %v2055 = vpop.f32.mrf.mxu0
        %v2056 = vadd.f32 %v1715, %v2055
        %v2057 = vpop.f32.mrf.mxu0
        %v2058 = vadd.f32 %v1717, %v2057
        %2059 = vmatprep.mubr.f32.mxu0 0.0
        %v2060 = vand.u32 %v717, 4294901760
        %v2061 = vsub.f32 %v717, %v2060
        %v2062 = vand.u32 %v2061, 4294901760
        %2063 = vmatmul.mubr.f32.gmra.mxu0 %v2062
        %v2064 = vpop.f32.mrf.mxu0
        %v2065 = vadd.f32 %v1723, %v2064
        %v2066 = vpop.f32.mrf.mxu0
        %v2067 = vadd.f32 %v1725, %v2066
        %2068 = vmatprep.mubr.f32.mxu0 0.0
        %v2069 = vand.u32 %v720, 4294901760
        %v2070 = vsub.f32 %v720, %v2069
        %v2071 = vand.u32 %v2070, 4294901760
        %2072 = vmatmul.mubr.f32.gmra.mxu0 %v2071
        %v2073 = vpop.f32.mrf.mxu0
        %v2074 = vadd.f32 %v1731, %v2073
        %v2075 = vpop.f32.mrf.mxu0
        %v2076 = vadd.f32 %v1733, %v2075
        %2077 = vmatprep.mubr.f32.mxu0 0.0
        %v2078 = vand.u32 %v723, 4294901760
        %v2079 = vsub.f32 %v723, %v2078
        %v2080 = vand.u32 %v2079, 4294901760
        %2081 = vmatmul.mubr.f32.gmra.mxu0 %v2080
        %v2082 = vpop.f32.mrf.mxu0
        %v2083 = vadd.f32 %v1739, %v2082
        %v2084 = vpop.f32.mrf.mxu0
        %v2085 = vadd.f32 %v1741, %v2084
        %2086 = vmatprep.mubr.f32.mxu0 0.0
        %v2087 = vand.u32 %v726, 4294901760
        %v2088 = vsub.f32 %v726, %v2087
        %v2089 = vand.u32 %v2088, 4294901760
        %2090 = vmatmul.mubr.f32.gmra.mxu0 %v2089
        %v2091 = vpop.f32.mrf.mxu0
        %v2092 = vadd.f32 %v1747, %v2091
        %v2093 = vpop.f32.mrf.mxu0
        %v2094 = vadd.f32 %v1749, %v2093
        %2095 = vmatprep.mubr.f32.mxu0 0.0
        %v2096 = vand.u32 %v729, 4294901760
        %v2097 = vsub.f32 %v729, %v2096
        %v2098 = vand.u32 %v2097, 4294901760
        %2099 = vmatmul.mubr.f32.gmra.mxu0 %v2098
        %v2100 = vpop.f32.mrf.mxu0
        %v2101 = vadd.f32 %v1755, %v2100
        %v2102 = vpop.f32.mrf.mxu0
        %v2103 = vadd.f32 %v1757, %v2102
        %2104 = vmatprep.mubr.f32.mxu0 0.0
        %v2105 = vand.u32 %v732, 4294901760
        %v2106 = vsub.f32 %v732, %v2105
        %v2107 = vand.u32 %v2106, 4294901760
        %2108 = vmatmul.mubr.f32.gmra.mxu0 %v2107
        %v2109 = vpop.f32.mrf.mxu0
        %v2110 = vadd.f32 %v1763, %v2109
        %v2111 = vpop.f32.mrf.mxu0
        %v2112 = vadd.f32 %v1765, %v2111
        %2113 = vmatprep.mubr.f32.mxu0 0.0
        %v2114 = vand.u32 %v735, 4294901760
        %v2115 = vsub.f32 %v735, %v2114
        %v2116 = vand.u32 %v2115, 4294901760
        %2117 = vmatmul.mubr.f32.gmra.mxu0 %v2116
        %v2118 = vpop.f32.mrf.mxu0
        %v2119 = vadd.f32 %v1771, %v2118
        %v2120 = vpop.f32.mrf.mxu0
        %v2121 = vadd.f32 %v1773, %v2120
        %2122 = vmatprep.mubr.f32.mxu0 0.0
        %v2123 = vand.u32 %v738, 4294901760
        %v2124 = vsub.f32 %v738, %v2123
        %v2125 = vand.u32 %v2124, 4294901760
        %2126 = vmatmul.mubr.f32.gmra.mxu0 %v2125
        %v2127 = vpop.f32.mrf.mxu0
        %v2128 = vadd.f32 %v1779, %v2127
        %v2129 = vpop.f32.mrf.mxu0
        %v2130 = vadd.f32 %v1781, %v2129
        %2131 = vmatprep.mubr.f32.mxu0 0.0
        %v2132 = vand.u32 %v741, 4294901760
        %v2133 = vsub.f32 %v741, %v2132
        %v2134 = vand.u32 %v2133, 4294901760
        %2135 = vmatmul.mubr.f32.gmra.mxu0 %v2134
        %v2136 = vpop.f32.mrf.mxu0
        %v2137 = vadd.f32 %v1787, %v2136
        %v2138 = vpop.f32.mrf.mxu0
        %v2139 = vadd.f32 %v1789, %v2138
        %2140 = vmatprep.mubr.f32.mxu0 0.0
        %v2141 = vand.u32 %v744, 4294901760
        %v2142 = vsub.f32 %v744, %v2141
        %v2143 = vand.u32 %v2142, 4294901760
        %2144 = vmatmul.mubr.f32.gmra.mxu0 %v2143
        %v2145 = vpop.f32.mrf.mxu0
        %v2146 = vadd.f32 %v1795, %v2145
        %v2147 = vpop.f32.mrf.mxu0
        %v2148 = vadd.f32 %v1797, %v2147
        %2149 = vmatprep.mubr.f32.mxu0 0.0
        %v2150 = vand.u32 %v747, 4294901760
        %v2151 = vsub.f32 %v747, %v2150
        %v2152 = vand.u32 %v2151, 4294901760
        %2153 = vmatmul.mubr.f32.gmra.mxu0 %v2152
        %v2154 = vpop.f32.mrf.mxu0
        %v2155 = vadd.f32 %v1803, %v2154
        %v2156 = vpop.f32.mrf.mxu0
        %v2157 = vadd.f32 %v1805, %v2156
        %2158 = vmatprep.mubr.f32.mxu0 0.0
        %v2159 = vand.u32 %v750, 4294901760
        %v2160 = vsub.f32 %v750, %v2159
        %v2161 = vand.u32 %v2160, 4294901760
        %2162 = vmatmul.mubr.f32.gmra.mxu0 %v2161
        %v2163 = vpop.f32.mrf.mxu0
        %v2164 = vadd.f32 %v1811, %v2163
        %v2165 = vpop.f32.mrf.mxu0
        %v2166 = vadd.f32 %v1813, %v2165
        %2167 = vmatprep.mubr.f32.mxu0 0.0
        %v2168 = vand.u32 %v753, 4294901760
        %v2169 = vsub.f32 %v753, %v2168
        %v2170 = vand.u32 %v2169, 4294901760
        %2171 = vmatmul.mubr.f32.gmra.mxu0 %v2170
        %v2172 = vpop.f32.mrf.mxu0
        %v2173 = vadd.f32 %v1819, %v2172
        %v2174 = vpop.f32.mrf.mxu0
        %v2175 = vadd.f32 %v1821, %v2174
        %2176 = vmatprep.mubr.f32.mxu0 0.0
        %v2177 = vand.u32 %v756, 4294901760
        %v2178 = vsub.f32 %v756, %v2177
        %v2179 = vand.u32 %v2178, 4294901760
        %2180 = vmatmul.mubr.f32.gmra.mxu0 %v2179
        %v2181 = vpop.f32.mrf.mxu0
        %v2182 = vadd.f32 %v1827, %v2181
        %v2183 = vpop.f32.mrf.mxu0
        %v2184 = vadd.f32 %v1829, %v2183
        %2185 = vmatprep.mubr.f32.mxu0 0.0
        %v2186 = vand.u32 %v759, 4294901760
        %v2187 = vsub.f32 %v759, %v2186
        %v2188 = vand.u32 %v2187, 4294901760
        %2189 = vmatmul.mubr.f32.gmra.mxu0 %v2188
        %v2190 = vpop.f32.mrf.mxu0
        %v2191 = vadd.f32 %v1835, %v2190
        %v2192 = vpop.f32.mrf.mxu0
        %v2193 = vadd.f32 %v1837, %v2192
        %2194 = vmatprep.mubr.f32.mxu0 0.0
        %v2195 = vand.u32 %v762, 4294901760
        %v2196 = vsub.f32 %v762, %v2195
        %v2197 = vand.u32 %v2196, 4294901760
        %2198 = vmatmul.mubr.f32.gmra.mxu0 %v2197
        %v2199 = vpop.f32.mrf.mxu0
        %v2200 = vadd.f32 %v1843, %v2199
        %v2201 = vpop.f32.mrf.mxu0
        %v2202 = vadd.f32 %v1845, %v2201
        %2203 = vmatprep.mubr.f32.mxu0 0.0
        %v2204 = vand.u32 %v765, 4294901760
        %v2205 = vsub.f32 %v765, %v2204
        %v2206 = vand.u32 %v2205, 4294901760
        %2207 = vmatmul.mubr.f32.gmra.mxu0 %v2206
        %v2208 = vpop.f32.mrf.mxu0
        %v2209 = vadd.f32 %v1851, %v2208
        %v2210 = vpop.f32.mrf.mxu0
        %v2211 = vadd.f32 %v1853, %v2210
        %2212 = vmatprep.mubr.f32.mxu0 0.0
        %v2213 = vand.u32 %v768, 4294901760
        %v2214 = vsub.f32 %v768, %v2213
        %v2215 = vand.u32 %v2214, 4294901760
        %2216 = vmatmul.mubr.f32.gmra.mxu0 %v2215
        %v2217 = vpop.f32.mrf.mxu0
        %v2218 = vadd.f32 %v1859, %v2217
        %v2219 = vpop.f32.mrf.mxu0
        %v2220 = vadd.f32 %v1861, %v2219
        %2221 = vmatprep.mubr.f32.mxu0 0.0
        %v2222 = vand.u32 %v771, 4294901760
        %v2223 = vsub.f32 %v771, %v2222
        %v2224 = vand.u32 %v2223, 4294901760
        %2225 = vmatmul.mubr.f32.gmra.mxu0 %v2224
        %v2226 = vpop.f32.mrf.mxu0
        %v2227 = vadd.f32 %v1867, %v2226
        %v2228 = vpop.f32.mrf.mxu0
        %v2229 = vadd.f32 %v1869, %v2228
        %2230 = vmatprep.mubr.f32.mxu0 0.0
        %v2231 = vand.u32 %v774, 4294901760
        %v2232 = vsub.f32 %v774, %v2231
        %v2233 = vand.u32 %v2232, 4294901760
        %2234 = vmatmul.mubr.f32.gmra.mxu0 %v2233
        %v2235 = vpop.f32.mrf.mxu0
        %v2236 = vadd.f32 %v1875, %v2235
        %v2237 = vpop.f32.mrf.mxu0
        %v2238 = vadd.f32 %v1877, %v2237
        %2239 = vmatprep.mubr.f32.mxu0 0.0
        %v2240 = vand.u32 %v777, 4294901760
        %v2241 = vsub.f32 %v777, %v2240
        %v2242 = vand.u32 %v2241, 4294901760
        %2243 = vmatmul.mubr.f32.gmra.mxu0 %v2242
        %v2244 = vpop.f32.mrf.mxu0
        %v2245 = vadd.f32 %v1883, %v2244
        %v2246 = vpop.f32.mrf.mxu0
        %v2247 = vadd.f32 %v1885, %v2246
        %2248 = vmatprep.mubr.f32.mxu0 0.0
        %v2249 = vand.u32 %v780, 4294901760
        %v2250 = vsub.f32 %v780, %v2249
        %v2251 = vand.u32 %v2250, 4294901760
        %2252 = vmatmul.mubr.f32.gmra.mxu0 %v2251
        %v2253 = vpop.f32.mrf.mxu0
        %v2254 = vadd.f32 %v1891, %v2253
        %v2255 = vpop.f32.mrf.mxu0
        %v2256 = vadd.f32 %v1893, %v2255
        %2257 = vmatprep.mubr.f32.mxu0 0.0
        %v2258 = vand.u32 %v783, 4294901760
        %v2259 = vsub.f32 %v783, %v2258
        %v2260 = vand.u32 %v2259, 4294901760
        %2261 = vmatmul.mubr.f32.gmra.mxu0 %v2260
        %v2262 = vpop.f32.mrf.mxu0
        %v2263 = vadd.f32 %v1899, %v2262
        %v2264 = vpop.f32.mrf.mxu0
        %v2265 = vadd.f32 %v1901, %v2264
        %2266 = vmatprep.mubr.f32.mxu0 0.0
        %v2267 = vand.u32 %v786, 4294901760
        %v2268 = vsub.f32 %v786, %v2267
        %v2269 = vand.u32 %v2268, 4294901760
        %2270 = vmatmul.mubr.f32.gmra.mxu0 %v2269
        %v2271 = vpop.f32.mrf.mxu0
        %v2272 = vadd.f32 %v1907, %v2271
        %v2273 = vpop.f32.mrf.mxu0
        %v2274 = vadd.f32 %v1909, %v2273
        %2275 = vdwg.mxu0
        %2276 = vmatprep.subr.mxu0 0.0
        %2277 = vmatpush1.msra.mxu0 0.0
        %2278 = vmatprep.subr.mxu0 0.0
        %2279 = vmatpush1.msra.mxu0 0.0
        %2280 = vmatprep.subr.mxu0 0.0
        %2281 = vmatpush1.msra.mxu0 0.0
        %2282 = vmatprep.subr.mxu0 0.0
        %2283 = vmatpush1.msra.mxu0 0.0
        %2284 = vmatprep.subr.mxu0 0.0
        %2285 = vmatpush1.msra.mxu0 0.0
        %2286 = vmatprep.subr.mxu0 0.0
        %2287 = vmatpush1.msra.mxu0 0.0
        %2288 = vmatprep.subr.mxu0 0.0
        %2289 = vmatpush1.msra.mxu0 0.0
        %2290 = vmatprep.subr.mxu0 0.0
        %2291 = vmatpush1.msra.mxu0 0.0
        %2292 = vmatprep.subr.mxu0 0.0
        %2293 = vmatpush1.msra.mxu0 0.0
        %2294 = vmatprep.subr.mxu0 0.0
        %2295 = vmatpush1.msra.mxu0 0.0
        %v2296 = vand.u32 %v690, 4294901760
        %v2297 = vsub.f32 %v690, %v2296
        %v2298 = vand.u32 %v2297, 4294901760
        %2299 = vmatprep.subr.mxu0 %v2298
        %v2300 = vand.u32 %v689, 4294901760
        %v2301 = vsub.f32 %v689, %v2300
        %v2302 = vand.u32 %v2301, 4294901760
        %2303 = vmatpush1.msra.mxu0 %v2302
        %v2304 = vand.u32 %v688, 4294901760
        %v2305 = vsub.f32 %v688, %v2304
        %v2306 = vand.u32 %v2305, 4294901760
        %2307 = vmatprep.subr.mxu0 %v2306
        %v2308 = vand.u32 %v687, 4294901760
        %v2309 = vsub.f32 %v687, %v2308
        %v2310 = vand.u32 %v2309, 4294901760
        %2311 = vmatpush1.msra.mxu0 %v2310
        %v2312 = vand.u32 %v686, 4294901760
        %v2313 = vsub.f32 %v686, %v2312
        %v2314 = vand.u32 %v2313, 4294901760
        %2315 = vmatprep.subr.mxu0 %v2314
        %v2316 = vand.u32 %v685, 4294901760
        %v2317 = vsub.f32 %v685, %v2316
        %v2318 = vand.u32 %v2317, 4294901760
        %2319 = vmatpush1.msra.mxu0 %v2318
        %v2320 = vand.u32 %v684, 4294901760
        %v2321 = vsub.f32 %v684, %v2320
        %v2322 = vand.u32 %v2321, 4294901760
        %2323 = vmatprep.subr.mxu0 %v2322
        %v2324 = vand.u32 %v683, 4294901760
        %v2325 = vsub.f32 %v683, %v2324
        %v2326 = vand.u32 %v2325, 4294901760
        %2327 = vmatpush1.msra.mxu0 %v2326
        %v2328 = vand.u32 %v682, 4294901760
        %v2329 = vsub.f32 %v682, %v2328
        %v2330 = vand.u32 %v2329, 4294901760
        %2331 = vmatprep.subr.mxu0 %v2330
        %v2332 = vand.u32 %v681, 4294901760
        %v2333 = vsub.f32 %v681, %v2332
        %v2334 = vand.u32 %v2333, 4294901760
        %2335 = vmatpush1.msra.mxu0 %v2334
        %v2336 = vand.u32 %v680, 4294901760
        %v2337 = vsub.f32 %v680, %v2336
        %v2338 = vand.u32 %v2337, 4294901760
        %2339 = vmatprep.subr.mxu0 %v2338
        %v2340 = vand.u32 %v679, 4294901760
        %v2341 = vsub.f32 %v679, %v2340
        %v2342 = vand.u32 %v2341, 4294901760
        %2343 = vmatpush1.msra.mxu0 %v2342
        %2344 = vmatprep.subr.mxu0 0.0
        %2345 = vmatpush2.msra.mxu0 0.0
        %2346 = vmatprep.subr.mxu0 0.0
        %2347 = vmatpush2.msra.mxu0 0.0
        %2348 = vmatprep.subr.mxu0 0.0
        %2349 = vmatpush2.msra.mxu0 0.0
        %2350 = vmatprep.subr.mxu0 0.0
        %2351 = vmatpush2.msra.mxu0 0.0
        %2352 = vmatprep.subr.mxu0 0.0
        %2353 = vmatpush2.msra.mxu0 0.0
        %2354 = vmatprep.subr.mxu0 0.0
        %2355 = vmatpush2.msra.mxu0 0.0
        %2356 = vmatprep.subr.mxu0 0.0
        %2357 = vmatpush2.msra.mxu0 0.0
        %2358 = vmatprep.subr.mxu0 0.0
        %2359 = vmatpush2.msra.mxu0 0.0
        %2360 = vmatprep.subr.mxu0 0.0
        %2361 = vmatpush2.msra.mxu0 0.0
        %2362 = vmatprep.subr.mxu0 0.0
        %2363 = vmatpush2.msra.mxu0 0.0
        %2364 = vmatprep.subr.mxu0 0.0
        %2365 = vmatpush2.msra.mxu0 0.0
        %2366 = vmatprep.subr.mxu0 0.0
        %2367 = vmatpush2.msra.mxu0 0.0
        %2368 = vmatprep.subr.mxu0 0.0
        %2369 = vmatpush2.msra.mxu0 0.0
        %2370 = vmatprep.subr.mxu0 0.0
        %2371 = vmatpush2.msra.mxu0 0.0
        %2372 = vmatprep.subr.mxu0 0.0
        %2373 = vmatpush2.msra.mxu0 0.0
        %2374 = vmatprep.subr.mxu0 0.0
        %2375 = vmatpush2.msra.mxu0 0.0
        %2376 = vmatprep.mubr.f32.mxu0 0.0
        %v2377 = vand.u32 %v693, 4294901760
        %2378 = vmatmul.mubr.f32.gmra.mxu0 %v2377
        %v2379 = vpop.f32.mrf.mxu0
        %v2380 = vadd.f32 %v1993, %v2379
        %v2381 = vpop.f32.mrf.mxu0
        %v2382 = vadd.f32 %v1995, %v2381
        %2383 = vmatprep.mubr.f32.mxu0 0.0
        %v2384 = vand.u32 %v696, 4294901760
        %2385 = vmatmul.mubr.f32.gmra.mxu0 %v2384
        %v2386 = vpop.f32.mrf.mxu0
        %v2387 = vadd.f32 %v2002, %v2386
        %v2388 = vpop.f32.mrf.mxu0
        %v2389 = vadd.f32 %v2004, %v2388
        %2390 = vmatprep.mubr.f32.mxu0 0.0
        %v2391 = vand.u32 %v699, 4294901760
        %2392 = vmatmul.mubr.f32.gmra.mxu0 %v2391
        %v2393 = vpop.f32.mrf.mxu0
        %v2394 = vadd.f32 %v2011, %v2393
        %v2395 = vpop.f32.mrf.mxu0
        %v2396 = vadd.f32 %v2013, %v2395
        %2397 = vmatprep.mubr.f32.mxu0 0.0
        %v2398 = vand.u32 %v702, 4294901760
        %2399 = vmatmul.mubr.f32.gmra.mxu0 %v2398
        %v2400 = vpop.f32.mrf.mxu0
        %v2401 = vadd.f32 %v2020, %v2400
        %v2402 = vpop.f32.mrf.mxu0
        %v2403 = vadd.f32 %v2022, %v2402
        %2404 = vmatprep.mubr.f32.mxu0 0.0
        %v2405 = vand.u32 %v705, 4294901760
        %2406 = vmatmul.mubr.f32.gmra.mxu0 %v2405
        %v2407 = vpop.f32.mrf.mxu0
        %v2408 = vadd.f32 %v2029, %v2407
        %v2409 = vpop.f32.mrf.mxu0
        %v2410 = vadd.f32 %v2031, %v2409
        %2411 = vmatprep.mubr.f32.mxu0 0.0
        %v2412 = vand.u32 %v708, 4294901760
        %2413 = vmatmul.mubr.f32.gmra.mxu0 %v2412
        %v2414 = vpop.f32.mrf.mxu0
        %v2415 = vadd.f32 %v2038, %v2414
        %v2416 = vpop.f32.mrf.mxu0
        %v2417 = vadd.f32 %v2040, %v2416
        %2418 = vmatprep.mubr.f32.mxu0 0.0
        %v2419 = vand.u32 %v711, 4294901760
        %2420 = vmatmul.mubr.f32.gmra.mxu0 %v2419
        %v2421 = vpop.f32.mrf.mxu0
        %v2422 = vadd.f32 %v2047, %v2421
        %v2423 = vpop.f32.mrf.mxu0
        %v2424 = vadd.f32 %v2049, %v2423
        %2425 = vmatprep.mubr.f32.mxu0 0.0
        %v2426 = vand.u32 %v714, 4294901760
        %2427 = vmatmul.mubr.f32.gmra.mxu0 %v2426
        %v2428 = vpop.f32.mrf.mxu0
        %v2429 = vadd.f32 %v2056, %v2428
        %v2430 = vpop.f32.mrf.mxu0
        %v2431 = vadd.f32 %v2058, %v2430
        %2432 = vmatprep.mubr.f32.mxu0 0.0
        %v2433 = vand.u32 %v717, 4294901760
        %2434 = vmatmul.mubr.f32.gmra.mxu0 %v2433
        %v2435 = vpop.f32.mrf.mxu0
        %v2436 = vadd.f32 %v2065, %v2435
        %v2437 = vpop.f32.mrf.mxu0
        %v2438 = vadd.f32 %v2067, %v2437
        %2439 = vmatprep.mubr.f32.mxu0 0.0
        %v2440 = vand.u32 %v720, 4294901760
        %2441 = vmatmul.mubr.f32.gmra.mxu0 %v2440
        %v2442 = vpop.f32.mrf.mxu0
        %v2443 = vadd.f32 %v2074, %v2442
        %v2444 = vpop.f32.mrf.mxu0
        %v2445 = vadd.f32 %v2076, %v2444
        %2446 = vmatprep.mubr.f32.mxu0 0.0
        %v2447 = vand.u32 %v723, 4294901760
        %2448 = vmatmul.mubr.f32.gmra.mxu0 %v2447
        %v2449 = vpop.f32.mrf.mxu0
        %v2450 = vadd.f32 %v2083, %v2449
        %v2451 = vpop.f32.mrf.mxu0
        %v2452 = vadd.f32 %v2085, %v2451
        %2453 = vmatprep.mubr.f32.mxu0 0.0
        %v2454 = vand.u32 %v726, 4294901760
        %2455 = vmatmul.mubr.f32.gmra.mxu0 %v2454
        %v2456 = vpop.f32.mrf.mxu0
        %v2457 = vadd.f32 %v2092, %v2456
        %v2458 = vpop.f32.mrf.mxu0
        %v2459 = vadd.f32 %v2094, %v2458
        %2460 = vmatprep.mubr.f32.mxu0 0.0
        %v2461 = vand.u32 %v729, 4294901760
        %2462 = vmatmul.mubr.f32.gmra.mxu0 %v2461
        %v2463 = vpop.f32.mrf.mxu0
        %v2464 = vadd.f32 %v2101, %v2463
        %v2465 = vpop.f32.mrf.mxu0
        %v2466 = vadd.f32 %v2103, %v2465
        %2467 = vmatprep.mubr.f32.mxu0 0.0
        %v2468 = vand.u32 %v732, 4294901760
        %2469 = vmatmul.mubr.f32.gmra.mxu0 %v2468
        %v2470 = vpop.f32.mrf.mxu0
        %v2471 = vadd.f32 %v2110, %v2470
        %v2472 = vpop.f32.mrf.mxu0
        %v2473 = vadd.f32 %v2112, %v2472
        %2474 = vmatprep.mubr.f32.mxu0 0.0
        %v2475 = vand.u32 %v735, 4294901760
        %2476 = vmatmul.mubr.f32.gmra.mxu0 %v2475
        %v2477 = vpop.f32.mrf.mxu0
        %v2478 = vadd.f32 %v2119, %v2477
        %v2479 = vpop.f32.mrf.mxu0
        %v2480 = vadd.f32 %v2121, %v2479
        %2481 = vmatprep.mubr.f32.mxu0 0.0
        %v2482 = vand.u32 %v738, 4294901760
        %2483 = vmatmul.mubr.f32.gmra.mxu0 %v2482
        %v2484 = vpop.f32.mrf.mxu0
        %v2485 = vadd.f32 %v2128, %v2484
        %v2486 = vpop.f32.mrf.mxu0
        %v2487 = vadd.f32 %v2130, %v2486
        %2488 = vmatprep.mubr.f32.mxu0 0.0
        %v2489 = vand.u32 %v741, 4294901760
        %2490 = vmatmul.mubr.f32.gmra.mxu0 %v2489
        %v2491 = vpop.f32.mrf.mxu0
        %v2492 = vadd.f32 %v2137, %v2491
        %v2493 = vpop.f32.mrf.mxu0
        %v2494 = vadd.f32 %v2139, %v2493
        %2495 = vmatprep.mubr.f32.mxu0 0.0
        %v2496 = vand.u32 %v744, 4294901760
        %2497 = vmatmul.mubr.f32.gmra.mxu0 %v2496
        %v2498 = vpop.f32.mrf.mxu0
        %v2499 = vadd.f32 %v2146, %v2498
        %v2500 = vpop.f32.mrf.mxu0
        %v2501 = vadd.f32 %v2148, %v2500
        %2502 = vmatprep.mubr.f32.mxu0 0.0
        %v2503 = vand.u32 %v747, 4294901760
        %2504 = vmatmul.mubr.f32.gmra.mxu0 %v2503
        %v2505 = vpop.f32.mrf.mxu0
        %v2506 = vadd.f32 %v2155, %v2505
        %v2507 = vpop.f32.mrf.mxu0
        %v2508 = vadd.f32 %v2157, %v2507
        %2509 = vmatprep.mubr.f32.mxu0 0.0
        %v2510 = vand.u32 %v750, 4294901760
        %2511 = vmatmul.mubr.f32.gmra.mxu0 %v2510
        %v2512 = vpop.f32.mrf.mxu0
        %v2513 = vadd.f32 %v2164, %v2512
        %v2514 = vpop.f32.mrf.mxu0
        %v2515 = vadd.f32 %v2166, %v2514
        %2516 = vmatprep.mubr.f32.mxu0 0.0
        %v2517 = vand.u32 %v753, 4294901760
        %2518 = vmatmul.mubr.f32.gmra.mxu0 %v2517
        %v2519 = vpop.f32.mrf.mxu0
        %v2520 = vadd.f32 %v2173, %v2519
        %v2521 = vpop.f32.mrf.mxu0
        %v2522 = vadd.f32 %v2175, %v2521
        %2523 = vmatprep.mubr.f32.mxu0 0.0
        %v2524 = vand.u32 %v756, 4294901760
        %2525 = vmatmul.mubr.f32.gmra.mxu0 %v2524
        %v2526 = vpop.f32.mrf.mxu0
        %v2527 = vadd.f32 %v2182, %v2526
        %v2528 = vpop.f32.mrf.mxu0
        %v2529 = vadd.f32 %v2184, %v2528
        %2530 = vmatprep.mubr.f32.mxu0 0.0
        %v2531 = vand.u32 %v759, 4294901760
        %2532 = vmatmul.mubr.f32.gmra.mxu0 %v2531
        %v2533 = vpop.f32.mrf.mxu0
        %v2534 = vadd.f32 %v2191, %v2533
        %v2535 = vpop.f32.mrf.mxu0
        %v2536 = vadd.f32 %v2193, %v2535
        %2537 = vmatprep.mubr.f32.mxu0 0.0
        %v2538 = vand.u32 %v762, 4294901760
        %2539 = vmatmul.mubr.f32.gmra.mxu0 %v2538
        %v2540 = vpop.f32.mrf.mxu0
        %v2541 = vadd.f32 %v2200, %v2540
        %v2542 = vpop.f32.mrf.mxu0
        %v2543 = vadd.f32 %v2202, %v2542
        %2544 = vmatprep.mubr.f32.mxu0 0.0
        %v2545 = vand.u32 %v765, 4294901760
        %2546 = vmatmul.mubr.f32.gmra.mxu0 %v2545
        %v2547 = vpop.f32.mrf.mxu0
        %v2548 = vadd.f32 %v2209, %v2547
        %v2549 = vpop.f32.mrf.mxu0
        %v2550 = vadd.f32 %v2211, %v2549
        %2551 = vmatprep.mubr.f32.mxu0 0.0
        %v2552 = vand.u32 %v768, 4294901760
        %2553 = vmatmul.mubr.f32.gmra.mxu0 %v2552
        %v2554 = vpop.f32.mrf.mxu0
        %v2555 = vadd.f32 %v2218, %v2554
        %v2556 = vpop.f32.mrf.mxu0
        %v2557 = vadd.f32 %v2220, %v2556
        %2558 = vmatprep.mubr.f32.mxu0 0.0
        %v2559 = vand.u32 %v771, 4294901760
        %2560 = vmatmul.mubr.f32.gmra.mxu0 %v2559
        %v2561 = vpop.f32.mrf.mxu0
        %v2562 = vadd.f32 %v2227, %v2561
        %v2563 = vpop.f32.mrf.mxu0
        %v2564 = vadd.f32 %v2229, %v2563
        %2565 = vmatprep.mubr.f32.mxu0 0.0
        %v2566 = vand.u32 %v774, 4294901760
        %2567 = vmatmul.mubr.f32.gmra.mxu0 %v2566
        %v2568 = vpop.f32.mrf.mxu0
        %v2569 = vadd.f32 %v2236, %v2568
        %v2570 = vpop.f32.mrf.mxu0
        %v2571 = vadd.f32 %v2238, %v2570
        %2572 = vmatprep.mubr.f32.mxu0 0.0
        %v2573 = vand.u32 %v777, 4294901760
        %2574 = vmatmul.mubr.f32.gmra.mxu0 %v2573
        %v2575 = vpop.f32.mrf.mxu0
        %v2576 = vadd.f32 %v2245, %v2575
        %v2577 = vpop.f32.mrf.mxu0
        %v2578 = vadd.f32 %v2247, %v2577
        %2579 = vmatprep.mubr.f32.mxu0 0.0
        %v2580 = vand.u32 %v780, 4294901760
        %2581 = vmatmul.mubr.f32.gmra.mxu0 %v2580
        %v2582 = vpop.f32.mrf.mxu0
        %v2583 = vadd.f32 %v2254, %v2582
        %v2584 = vpop.f32.mrf.mxu0
        %v2585 = vadd.f32 %v2256, %v2584
        %2586 = vmatprep.mubr.f32.mxu0 0.0
        %v2587 = vand.u32 %v783, 4294901760
        %2588 = vmatmul.mubr.f32.gmra.mxu0 %v2587
        %v2589 = vpop.f32.mrf.mxu0
        %v2590 = vadd.f32 %v2263, %v2589
        %v2591 = vpop.f32.mrf.mxu0
        %v2592 = vadd.f32 %v2265, %v2591
        %2593 = vmatprep.mubr.f32.mxu0 0.0
        %v2594 = vand.u32 %v786, 4294901760
        %2595 = vmatmul.mubr.f32.gmra.mxu0 %v2594
        %v2596 = vpop.f32.mrf.mxu0
        %v2597 = vadd.f32 %v2272, %v2596
        %v2598 = vpop.f32.mrf.mxu0
        %v2599 = vadd.f32 %v2274, %v2598
        %2600 = vdwg.mxu0
        %2601 = vmatprep.subr.mxu0 0.0
        %2602 = vmatpush1.msra.mxu0 0.0
        %2603 = vmatprep.subr.mxu0 0.0
        %2604 = vmatpush1.msra.mxu0 0.0
        %2605 = vmatprep.subr.mxu0 0.0
        %2606 = vmatpush1.msra.mxu0 0.0
        %2607 = vmatprep.subr.mxu0 0.0
        %2608 = vmatpush1.msra.mxu0 0.0
        %2609 = vmatprep.subr.mxu0 0.0
        %2610 = vmatpush1.msra.mxu0 0.0
        %2611 = vmatprep.subr.mxu0 0.0
        %2612 = vmatpush1.msra.mxu0 0.0
        %2613 = vmatprep.subr.mxu0 0.0
        %2614 = vmatpush1.msra.mxu0 0.0
        %2615 = vmatprep.subr.mxu0 0.0
        %2616 = vmatpush1.msra.mxu0 0.0
        %2617 = vmatprep.subr.mxu0 0.0
        %2618 = vmatpush1.msra.mxu0 0.0
        %2619 = vmatprep.subr.mxu0 0.0
        %2620 = vmatpush1.msra.mxu0 0.0
        %v2621 = vand.u32 %v690, 4294901760
        %2622 = vmatprep.subr.mxu0 %v2621
        %v2623 = vand.u32 %v689, 4294901760
        %2624 = vmatpush1.msra.mxu0 %v2623
        %v2625 = vand.u32 %v688, 4294901760
        %2626 = vmatprep.subr.mxu0 %v2625
        %v2627 = vand.u32 %v687, 4294901760
        %2628 = vmatpush1.msra.mxu0 %v2627
        %v2629 = vand.u32 %v686, 4294901760
        %2630 = vmatprep.subr.mxu0 %v2629
        %v2631 = vand.u32 %v685, 4294901760
        %2632 = vmatpush1.msra.mxu0 %v2631
        %v2633 = vand.u32 %v684, 4294901760
        %2634 = vmatprep.subr.mxu0 %v2633
        %v2635 = vand.u32 %v683, 4294901760
        %2636 = vmatpush1.msra.mxu0 %v2635
        %v2637 = vand.u32 %v682, 4294901760
        %2638 = vmatprep.subr.mxu0 %v2637
        %v2639 = vand.u32 %v681, 4294901760
        %2640 = vmatpush1.msra.mxu0 %v2639
        %v2641 = vand.u32 %v680, 4294901760
        %2642 = vmatprep.subr.mxu0 %v2641
        %v2643 = vand.u32 %v679, 4294901760
        %2644 = vmatpush1.msra.mxu0 %v2643
        %2645 = vmatprep.subr.mxu0 0.0
        %2646 = vmatpush2.msra.mxu0 0.0
        %2647 = vmatprep.subr.mxu0 0.0
        %2648 = vmatpush2.msra.mxu0 0.0
        %2649 = vmatprep.subr.mxu0 0.0
        %2650 = vmatpush2.msra.mxu0 0.0
        %2651 = vmatprep.subr.mxu0 0.0
        %2652 = vmatpush2.msra.mxu0 0.0
        %2653 = vmatprep.subr.mxu0 0.0
        %2654 = vmatpush2.msra.mxu0 0.0
        %2655 = vmatprep.subr.mxu0 0.0
        %2656 = vmatpush2.msra.mxu0 0.0
        %2657 = vmatprep.subr.mxu0 0.0
        %2658 = vmatpush2.msra.mxu0 0.0
        %2659 = vmatprep.subr.mxu0 0.0
        %2660 = vmatpush2.msra.mxu0 0.0
        %2661 = vmatprep.subr.mxu0 0.0
        %2662 = vmatpush2.msra.mxu0 0.0
        %2663 = vmatprep.subr.mxu0 0.0
        %2664 = vmatpush2.msra.mxu0 0.0
        %2665 = vmatprep.subr.mxu0 0.0
        %2666 = vmatpush2.msra.mxu0 0.0
        %2667 = vmatprep.subr.mxu0 0.0
        %2668 = vmatpush2.msra.mxu0 0.0
        %2669 = vmatprep.subr.mxu0 0.0
        %2670 = vmatpush2.msra.mxu0 0.0
        %2671 = vmatprep.subr.mxu0 0.0
        %2672 = vmatpush2.msra.mxu0 0.0
        %2673 = vmatprep.subr.mxu0 0.0
        %2674 = vmatpush2.msra.mxu0 0.0
        %2675 = vmatprep.subr.mxu0 0.0
        %2676 = vmatpush2.msra.mxu0 0.0
        %2677 = vmatprep.mubr.f32.mxu0 0.0
        %v2678 = vand.u32 %v693, 4294901760
        %2679 = vmatmul.mubr.f32.gmra.mxu0 %v2678
        %v2680 = vpop.f32.mrf.mxu0
        %v2681 = vadd.f32 %v2380, %v2680
        %v2682 = vpop.f32.mrf.mxu0
        %v2683 = vadd.f32 %v2382, %v2682
        %2684 = vmatprep.mubr.f32.mxu0 0.0
        %v2685 = vand.u32 %v696, 4294901760
        %2686 = vmatmul.mubr.f32.gmra.mxu0 %v2685
        %v2687 = vpop.f32.mrf.mxu0
        %v2688 = vadd.f32 %v2387, %v2687
        %v2689 = vpop.f32.mrf.mxu0
        %v2690 = vadd.f32 %v2389, %v2689
        %2691 = vmatprep.mubr.f32.mxu0 0.0
        %v2692 = vand.u32 %v699, 4294901760
        %2693 = vmatmul.mubr.f32.gmra.mxu0 %v2692
        %v2694 = vpop.f32.mrf.mxu0
        %v2695 = vadd.f32 %v2394, %v2694
        %v2696 = vpop.f32.mrf.mxu0
        %v2697 = vadd.f32 %v2396, %v2696
        %2698 = vmatprep.mubr.f32.mxu0 0.0
        %v2699 = vand.u32 %v702, 4294901760
        %2700 = vmatmul.mubr.f32.gmra.mxu0 %v2699
        %v2701 = vpop.f32.mrf.mxu0
        %v2702 = vadd.f32 %v2401, %v2701
        %v2703 = vpop.f32.mrf.mxu0
        %v2704 = vadd.f32 %v2403, %v2703
        %2705 = vmatprep.mubr.f32.mxu0 0.0
        %v2706 = vand.u32 %v705, 4294901760
        %2707 = vmatmul.mubr.f32.gmra.mxu0 %v2706
        %v2708 = vpop.f32.mrf.mxu0
        %v2709 = vadd.f32 %v2408, %v2708
        %v2710 = vpop.f32.mrf.mxu0
        %v2711 = vadd.f32 %v2410, %v2710
        %2712 = vmatprep.mubr.f32.mxu0 0.0
        %v2713 = vand.u32 %v708, 4294901760
        %2714 = vmatmul.mubr.f32.gmra.mxu0 %v2713
        %v2715 = vpop.f32.mrf.mxu0
        %v2716 = vadd.f32 %v2415, %v2715
        %v2717 = vpop.f32.mrf.mxu0
        %v2718 = vadd.f32 %v2417, %v2717
        %2719 = vmatprep.mubr.f32.mxu0 0.0
        %v2720 = vand.u32 %v711, 4294901760
        %2721 = vmatmul.mubr.f32.gmra.mxu0 %v2720
        %v2722 = vpop.f32.mrf.mxu0
        %v2723 = vadd.f32 %v2422, %v2722
        %v2724 = vpop.f32.mrf.mxu0
        %v2725 = vadd.f32 %v2424, %v2724
        %2726 = vmatprep.mubr.f32.mxu0 0.0
        %v2727 = vand.u32 %v714, 4294901760
        %2728 = vmatmul.mubr.f32.gmra.mxu0 %v2727
        %v2729 = vpop.f32.mrf.mxu0
        %v2730 = vadd.f32 %v2429, %v2729
        %v2731 = vpop.f32.mrf.mxu0
        %v2732 = vadd.f32 %v2431, %v2731
        %2733 = vmatprep.mubr.f32.mxu0 0.0
        %v2734 = vand.u32 %v717, 4294901760
        %2735 = vmatmul.mubr.f32.gmra.mxu0 %v2734
        %v2736 = vpop.f32.mrf.mxu0
        %v2737 = vadd.f32 %v2436, %v2736
        %v2738 = vpop.f32.mrf.mxu0
        %v2739 = vadd.f32 %v2438, %v2738
        %2740 = vmatprep.mubr.f32.mxu0 0.0
        %v2741 = vand.u32 %v720, 4294901760
        %2742 = vmatmul.mubr.f32.gmra.mxu0 %v2741
        %v2743 = vpop.f32.mrf.mxu0
        %v2744 = vadd.f32 %v2443, %v2743
        %v2745 = vpop.f32.mrf.mxu0
        %v2746 = vadd.f32 %v2445, %v2745
        %2747 = vmatprep.mubr.f32.mxu0 0.0
        %v2748 = vand.u32 %v723, 4294901760
        %2749 = vmatmul.mubr.f32.gmra.mxu0 %v2748
        %v2750 = vpop.f32.mrf.mxu0
        %v2751 = vadd.f32 %v2450, %v2750
        %v2752 = vpop.f32.mrf.mxu0
        %v2753 = vadd.f32 %v2452, %v2752
        %2754 = vmatprep.mubr.f32.mxu0 0.0
        %v2755 = vand.u32 %v726, 4294901760
        %2756 = vmatmul.mubr.f32.gmra.mxu0 %v2755
        %v2757 = vpop.f32.mrf.mxu0
        %v2758 = vadd.f32 %v2457, %v2757
        %v2759 = vpop.f32.mrf.mxu0
        %v2760 = vadd.f32 %v2459, %v2759
        %2761 = vmatprep.mubr.f32.mxu0 0.0
        %v2762 = vand.u32 %v729, 4294901760
        %2763 = vmatmul.mubr.f32.gmra.mxu0 %v2762
        %v2764 = vpop.f32.mrf.mxu0
        %v2765 = vadd.f32 %v2464, %v2764
        %v2766 = vpop.f32.mrf.mxu0
        %v2767 = vadd.f32 %v2466, %v2766
        %2768 = vmatprep.mubr.f32.mxu0 0.0
        %v2769 = vand.u32 %v732, 4294901760
        %2770 = vmatmul.mubr.f32.gmra.mxu0 %v2769
        %v2771 = vpop.f32.mrf.mxu0
        %v2772 = vadd.f32 %v2471, %v2771
        %v2773 = vpop.f32.mrf.mxu0
        %v2774 = vadd.f32 %v2473, %v2773
        %2775 = vmatprep.mubr.f32.mxu0 0.0
        %v2776 = vand.u32 %v735, 4294901760
        %2777 = vmatmul.mubr.f32.gmra.mxu0 %v2776
        %v2778 = vpop.f32.mrf.mxu0
        %v2779 = vadd.f32 %v2478, %v2778
        %v2780 = vpop.f32.mrf.mxu0
        %v2781 = vadd.f32 %v2480, %v2780
        %2782 = vmatprep.mubr.f32.mxu0 0.0
        %v2783 = vand.u32 %v738, 4294901760
        %2784 = vmatmul.mubr.f32.gmra.mxu0 %v2783
        %v2785 = vpop.f32.mrf.mxu0
        %v2786 = vadd.f32 %v2485, %v2785
        %v2787 = vpop.f32.mrf.mxu0
        %v2788 = vadd.f32 %v2487, %v2787
        %2789 = vmatprep.mubr.f32.mxu0 0.0
        %v2790 = vand.u32 %v741, 4294901760
        %2791 = vmatmul.mubr.f32.gmra.mxu0 %v2790
        %v2792 = vpop.f32.mrf.mxu0
        %v2793 = vadd.f32 %v2492, %v2792
        %v2794 = vpop.f32.mrf.mxu0
        %v2795 = vadd.f32 %v2494, %v2794
        %2796 = vmatprep.mubr.f32.mxu0 0.0
        %v2797 = vand.u32 %v744, 4294901760
        %2798 = vmatmul.mubr.f32.gmra.mxu0 %v2797
        %v2799 = vpop.f32.mrf.mxu0
        %v2800 = vadd.f32 %v2499, %v2799
        %v2801 = vpop.f32.mrf.mxu0
        %v2802 = vadd.f32 %v2501, %v2801
        %2803 = vmatprep.mubr.f32.mxu0 0.0
        %v2804 = vand.u32 %v747, 4294901760
        %2805 = vmatmul.mubr.f32.gmra.mxu0 %v2804
        %v2806 = vpop.f32.mrf.mxu0
        %v2807 = vadd.f32 %v2506, %v2806
        %v2808 = vpop.f32.mrf.mxu0
        %v2809 = vadd.f32 %v2508, %v2808
        %2810 = vmatprep.mubr.f32.mxu0 0.0
        %v2811 = vand.u32 %v750, 4294901760
        %2812 = vmatmul.mubr.f32.gmra.mxu0 %v2811
        %v2813 = vpop.f32.mrf.mxu0
        %v2814 = vadd.f32 %v2513, %v2813
        %v2815 = vpop.f32.mrf.mxu0
        %v2816 = vadd.f32 %v2515, %v2815
        %2817 = vmatprep.mubr.f32.mxu0 0.0
        %v2818 = vand.u32 %v753, 4294901760
        %2819 = vmatmul.mubr.f32.gmra.mxu0 %v2818
        %v2820 = vpop.f32.mrf.mxu0
        %v2821 = vadd.f32 %v2520, %v2820
        %v2822 = vpop.f32.mrf.mxu0
        %v2823 = vadd.f32 %v2522, %v2822
        %2824 = vmatprep.mubr.f32.mxu0 0.0
        %v2825 = vand.u32 %v756, 4294901760
        %2826 = vmatmul.mubr.f32.gmra.mxu0 %v2825
        %v2827 = vpop.f32.mrf.mxu0
        %v2828 = vadd.f32 %v2527, %v2827
        %v2829 = vpop.f32.mrf.mxu0
        %v2830 = vadd.f32 %v2529, %v2829
        %2831 = vmatprep.mubr.f32.mxu0 0.0
        %v2832 = vand.u32 %v759, 4294901760
        %2833 = vmatmul.mubr.f32.gmra.mxu0 %v2832
        %v2834 = vpop.f32.mrf.mxu0
        %v2835 = vadd.f32 %v2534, %v2834
        %v2836 = vpop.f32.mrf.mxu0
        %v2837 = vadd.f32 %v2536, %v2836
        %2838 = vmatprep.mubr.f32.mxu0 0.0
        %v2839 = vand.u32 %v762, 4294901760
        %2840 = vmatmul.mubr.f32.gmra.mxu0 %v2839
        %v2841 = vpop.f32.mrf.mxu0
        %v2842 = vadd.f32 %v2541, %v2841
        %v2843 = vpop.f32.mrf.mxu0
        %v2844 = vadd.f32 %v2543, %v2843
        %2845 = vmatprep.mubr.f32.mxu0 0.0
        %v2846 = vand.u32 %v765, 4294901760
        %2847 = vmatmul.mubr.f32.gmra.mxu0 %v2846
        %v2848 = vpop.f32.mrf.mxu0
        %v2849 = vadd.f32 %v2548, %v2848
        %v2850 = vpop.f32.mrf.mxu0
        %v2851 = vadd.f32 %v2550, %v2850
        %2852 = vmatprep.mubr.f32.mxu0 0.0
        %v2853 = vand.u32 %v768, 4294901760
        %2854 = vmatmul.mubr.f32.gmra.mxu0 %v2853
        %v2855 = vpop.f32.mrf.mxu0
        %v2856 = vadd.f32 %v2555, %v2855
        %v2857 = vpop.f32.mrf.mxu0
        %v2858 = vadd.f32 %v2557, %v2857
        %2859 = vmatprep.mubr.f32.mxu0 0.0
        %v2860 = vand.u32 %v771, 4294901760
        %2861 = vmatmul.mubr.f32.gmra.mxu0 %v2860
        %v2862 = vpop.f32.mrf.mxu0
        %v2863 = vadd.f32 %v2562, %v2862
        %v2864 = vpop.f32.mrf.mxu0
        %v2865 = vadd.f32 %v2564, %v2864
        %2866 = vmatprep.mubr.f32.mxu0 0.0
        %v2867 = vand.u32 %v774, 4294901760
        %2868 = vmatmul.mubr.f32.gmra.mxu0 %v2867
        %v2869 = vpop.f32.mrf.mxu0
        %v2870 = vadd.f32 %v2569, %v2869
        %v2871 = vpop.f32.mrf.mxu0
        %v2872 = vadd.f32 %v2571, %v2871
        %2873 = vmatprep.mubr.f32.mxu0 0.0
        %v2874 = vand.u32 %v777, 4294901760
        %2875 = vmatmul.mubr.f32.gmra.mxu0 %v2874
        %v2876 = vpop.f32.mrf.mxu0
        %v2877 = vadd.f32 %v2576, %v2876
        %v2878 = vpop.f32.mrf.mxu0
        %v2879 = vadd.f32 %v2578, %v2878
        %2880 = vmatprep.mubr.f32.mxu0 0.0
        %v2881 = vand.u32 %v780, 4294901760
        %2882 = vmatmul.mubr.f32.gmra.mxu0 %v2881
        %v2883 = vpop.f32.mrf.mxu0
        %v2884 = vadd.f32 %v2583, %v2883
        %v2885 = vpop.f32.mrf.mxu0
        %v2886 = vadd.f32 %v2585, %v2885
        %2887 = vmatprep.mubr.f32.mxu0 0.0
        %v2888 = vand.u32 %v783, 4294901760
        %2889 = vmatmul.mubr.f32.gmra.mxu0 %v2888
        %v2890 = vpop.f32.mrf.mxu0
        %v2891 = vadd.f32 %v2590, %v2890
        %v2892 = vpop.f32.mrf.mxu0
        %v2893 = vadd.f32 %v2592, %v2892
        %2894 = vmatprep.mubr.f32.mxu0 0.0
        %v2895 = vand.u32 %v786, 4294901760
        %2896 = vmatmul.mubr.f32.gmra.mxu0 %v2895
        %v2897 = vpop.f32.mrf.mxu0
        %v2898 = vadd.f32 %v2597, %v2897
        %v2899 = vpop.f32.mrf.mxu0
        %v2900 = vadd.f32 %v2599, %v2899
        %2901 = vdwg.mxu0
        %2902 = vst [vmem:[%s180] sm:$0xff] %v2681
        %2903 = vst [vmem:[%s180 + $0x8] sm:$0xff] %v2683
        %2904 = vst [vmem:[%s180 + $0x10] sm:$0xff] %v2688
        %2905 = vst [vmem:[%s180 + $0x18] sm:$0xff] %v2690
        %2906 = vst [vmem:[%s180 + $0x20] sm:$0xff] %v2695
        %2907 = vst [vmem:[%s180 + $0x28] sm:$0xff] %v2697
        %2908 = vst [vmem:[%s180 + $0x30] sm:$0xff] %v2702
        %2909 = vst [vmem:[%s180 + $0x38] sm:$0xff] %v2704
        %2910 = vst [vmem:[%s180 + $0x40] sm:$0xff] %v2709
        %2911 = vst [vmem:[%s180 + $0x48] sm:$0xff] %v2711
        %2912 = vst [vmem:[%s180 + $0x50] sm:$0xff] %v2716
        %2913 = vst [vmem:[%s180 + $0x58] sm:$0xff] %v2718
        %2914 = vst [vmem:[%s180 + $0x60] sm:$0xff] %v2723
        %2915 = vst [vmem:[%s180 + $0x68] sm:$0xff] %v2725
        %2916 = vst [vmem:[%s180 + $0x70] sm:$0xff] %v2730
        %2917 = vst [vmem:[%s180 + $0x78] sm:$0xff] %v2732
        %2918 = vst [vmem:[%s180 + $0x80] sm:$0xff] %v2737
        %2919 = vst [vmem:[%s180 + $0x88] sm:$0xff] %v2739
        %2920 = vst [vmem:[%s180 + $0x90] sm:$0xff] %v2744
        %2921 = vst [vmem:[%s180 + $0x98] sm:$0xff] %v2746
        %2922 = vst [vmem:[%s180 + $0xa0] sm:$0xff] %v2751
        %2923 = vst [vmem:[%s180 + $0xa8] sm:$0xff] %v2753
        %2924 = vst [vmem:[%s180 + $0xb0] sm:$0xff] %v2758
        %2925 = vst [vmem:[%s180 + $0xb8] sm:$0xff] %v2760
        %2926 = vst [vmem:[%s180 + $0xc0] sm:$0xff] %v2765
        %2927 = vst [vmem:[%s180 + $0xc8] sm:$0xff] %v2767
        %2928 = vst [vmem:[%s180 + $0xd0] sm:$0xff] %v2772
        %2929 = vst [vmem:[%s180 + $0xd8] sm:$0xff] %v2774
        %2930 = vst [vmem:[%s180 + $0xe0] sm:$0xff] %v2779
        %2931 = vst [vmem:[%s180 + $0xe8] sm:$0xff] %v2781
        %2932 = vst [vmem:[%s180 + $0xf0] sm:$0xff] %v2786
        %2933 = vst [vmem:[%s180 + $0xf8] sm:$0xff] %v2788
        %2934 = vst [vmem:[%s180 + $0x100] sm:$0xff] %v2793
        %2935 = vst [vmem:[%s180 + $0x108] sm:$0xff] %v2795
        %2936 = vst [vmem:[%s180 + $0x110] sm:$0xff] %v2800
        %2937 = vst [vmem:[%s180 + $0x118] sm:$0xff] %v2802
        %2938 = vst [vmem:[%s180 + $0x120] sm:$0xff] %v2807
        %2939 = vst [vmem:[%s180 + $0x128] sm:$0xff] %v2809
        %2940 = vst [vmem:[%s180 + $0x130] sm:$0xff] %v2814
        %2941 = vst [vmem:[%s180 + $0x138] sm:$0xff] %v2816
        %2942 = vst [vmem:[%s180 + $0x140] sm:$0xff] %v2821
        %2943 = vst [vmem:[%s180 + $0x148] sm:$0xff] %v2823
        %2944 = vst [vmem:[%s180 + $0x150] sm:$0xff] %v2828
        %2945 = vst [vmem:[%s180 + $0x158] sm:$0xff] %v2830
        %2946 = vst [vmem:[%s180 + $0x160] sm:$0xff] %v2835
        %2947 = vst [vmem:[%s180 + $0x168] sm:$0xff] %v2837
        %2948 = vst [vmem:[%s180 + $0x170] sm:$0xff] %v2842
        %2949 = vst [vmem:[%s180 + $0x178] sm:$0xff] %v2844
        %2950 = vst [vmem:[%s180 + $0x180] sm:$0xff] %v2849
        %2951 = vst [vmem:[%s180 + $0x188] sm:$0xff] %v2851
        %2952 = vst [vmem:[%s180 + $0x190] sm:$0xff] %v2856
        %2953 = vst [vmem:[%s180 + $0x198] sm:$0xff] %v2858
        %2954 = vst [vmem:[%s180 + $0x1a0] sm:$0xff] %v2863
        %2955 = vst [vmem:[%s180 + $0x1a8] sm:$0xff] %v2865
        %2956 = vst [vmem:[%s180 + $0x1b0] sm:$0xff] %v2870
        %2957 = vst [vmem:[%s180 + $0x1b8] sm:$0xff] %v2872
        %2958 = vst [vmem:[%s180 + $0x1c0] sm:$0xff] %v2877
        %2959 = vst [vmem:[%s180 + $0x1c8] sm:$0xff] %v2879
        %2960 = vst [vmem:[%s180 + $0x1d0] sm:$0xff] %v2884
        %2961 = vst [vmem:[%s180 + $0x1d8] sm:$0xff] %v2886
        %2962 = vst [vmem:[%s180 + $0x1e0] sm:$0xff] %v2891
        %2963 = vst [vmem:[%s180 + $0x1e8] sm:$0xff] %v2893
        %2964 = vst [vmem:[%s180 + $0x1f0] sm:$0xff] %v2898
        %2965 = vst [vmem:[%s180 + $0x1f8] sm:$0xff] %v2900
        %s2966 = sand.u32 %s98, 1
        %s2967 = scalar_lea.sflag [#allocation3], %s2966
        %s2968 = sand.u32 %s98, 1
        %s2969 = smul.addr %s2968, 512
        %s2970 = scalar_lea.vmem [#allocation2], %s2969
        // Predicated region
        $region33: #{tpu_custom_call.1} parent=31 // pred_check
          %p2971 = pneg %p108
        $region34: #{tpu_custom_call.1} parent=31 // pred_check_branch
          %2973 = sbr.rel (%p2971) target = $region36
        $region35: #{tpu_custom_call.1} parent=31 // pred_region
          %s2974 = smul.u32 32, %s17
          %s2976 = ssub.s32 8192, 8192
          %2977 = vsyncadd %s2967, %s2976
          %s2978 = smul.addr %s2974, 2
          %s2979 = smul.addr %s2978, 128
          %s2980 = scalar_lea.hbm %s3, %s2979
          %s2981 = sshll.u32 %s2970, 4
          %s2982 = int_to_ptr.vmem [resolvable:$true] %s2981
          %2987 = dma.vmem_to_hbm [thread:$0]  %s2982, 8192, %s2980, %s2967, 256, 256, 16
        $region36: #{tpu_custom_call.1} parent=31 // pred_fallthru
          _
      $region32: #{tpu_custom_call.1} parent=5 // pred_fallthru
        _
      %p2988 = scmp.le.s32.totalorder 2, %s12
      // Predicated region
      $region37: #{tpu_custom_call.1} parent=5 // pred_check
        %p2989 = pneg %p2988
      $region38: #{tpu_custom_call.1} parent=5 // pred_check_branch
        %2991 = sbr.rel (%p2989) target = $region40
      $region39: #{tpu_custom_call.1} parent=5 // pred_region
        %s2992 = ssub.s32 %s12, 2
        // Predicated region
        $region41: #{tpu_custom_call.1} parent=39 // pred_check
          %p2993 = pneg %p114
        $region42: #{tpu_custom_call.1} parent=39 // pred_check_branch
          %2995 = sbr.rel (%p2993) target = $region44
        $region43: #{tpu_custom_call.1} parent=39 // pred_region
          %s2996 = sand.u32 %s99, 1
          %s2997 = scalar_lea.sflag [#allocation3], %s2996
          %s2998 = sand.u32 %s99, 1
          %s2999 = smul.addr %s2998, 512
          %s3000 = scalar_lea.vmem [#allocation2], %s2999
          %3001 = dma.done %s2997, 8192
        $region44: #{tpu_custom_call.1} parent=39 // pred_fallthru
          _
      $region40: #{tpu_custom_call.1} parent=5 // pred_fallthru
        _
    $region6: #{tpu_custom_call.1} parent=1 // loop_footer
      %s16 = sadd.s32 1, %s12
    $region7: #{tpu_custom_call.1} parent=1 // loop_footer_branch
      %11 = sbr.rel target = $region3
    $region8: #{tpu_custom_call.1} parent=1 // loop_exit
      _
    %3002 = vsyncpa [#allocation3], 1
    %s3003 = scalar_lea.sflag [#allocation3], 1
    %3004 = vsyncpa %s3003, 1

</llo_original>
